<compile_context>
chip_gen: v5e
topology: v5e:2x2
jax: 0.10.0
libtpu: 0.0.40
codegen_flags: <defaults>
</compile_context>

<pallas_src>
import functools

import jax
import jax.numpy as jnp
from jax.experimental import pallas as pl
from jax.experimental.pallas import tpu as pltpu

EPS = 1e-5
_VMEM_LIMIT = 48 * 1024 * 1024  # explicit; leaves headroom on v7x's 64 MiB VMEM


def _pick_tile(m, cap=512):
    """Spatial tile (rows of the flattened H*W axis): full dim if small, else 512."""
    return m if m <= cap else cap


# ----------------------------- Pallas kernels ------------------------------


def _matmul_bn_act_kernel(x_ref, w_ref, scale_ref, shift_ref, o_ref, *, act):
    """One MXU dot (bf16 operands, f32 accumulate) + folded-BN scale/shift (+ ReLU)."""
    acc = jnp.dot(x_ref[0], w_ref[...], preferred_element_type=jnp.float32)
    y = acc * scale_ref[...] + shift_ref[...]
    if act == "relu":
        y = jnp.maximum(y, 0.0)
    o_ref[0] = y.astype(o_ref.dtype)


def matmul_bn_act(x, w, scale, shift, act, out_dtype, tm):
    """x: (N, M, K), w: (K, Cout), scale/shift: (1, Cout) f32 -> (N, M, Cout)."""
    n, m, k = x.shape
    cout = w.shape[-1]
    return pl.pallas_call(
        functools.partial(_matmul_bn_act_kernel, act=act),
        out_shape=jax.ShapeDtypeStruct((n, m, cout), out_dtype),
        grid=(n, pl.cdiv(m, tm)),
        in_specs=[
            pl.BlockSpec((1, tm, k), lambda i, j: (i, j, 0)),
            pl.BlockSpec((k, cout), lambda i, j: (0, 0)),
            pl.BlockSpec((1, cout), lambda i, j: (0, 0)),
            pl.BlockSpec((1, cout), lambda i, j: (0, 0)),
        ],
        out_specs=pl.BlockSpec((1, tm, cout), lambda i, j: (i, j, 0)),
        compiler_params=pltpu.CompilerParams(
            dimension_semantics=("parallel", "parallel"),
            vmem_limit_bytes=_VMEM_LIMIT,
        ),
    )(x, w, scale, shift)


def _tail_kernel(*refs, has_coef):
    """Fused: conv3(1x1)+BN3 [+ SE coef mul] + shortcut(1x1)+BN + residual add + ReLU."""
    if has_coef:
        (h2_ref, w3_ref, s3_ref, b3_ref, xs_ref, ws_ref, ss_ref, bs_ref,
         coef_ref, o_ref) = refs
    else:
        (h2_ref, w3_ref, s3_ref, b3_ref, xs_ref, ws_ref, ss_ref, bs_ref,
         o_ref) = refs
        coef_ref = None
    h3 = jnp.dot(h2_ref[0], w3_ref[...], preferred_element_type=jnp.float32)
    h3 = h3 * s3_ref[...] + b3_ref[...]
    if has_coef:
        h3 = h3 * coef_ref[0]
    sc = jnp.dot(xs_ref[0], ws_ref[...], preferred_element_type=jnp.float32)
    sc = sc * ss_ref[...] + bs_ref[...]
    o_ref[0] = jnp.maximum(h3 + sc, 0.0).astype(o_ref.dtype)


def bottleneck_tail(h2, w3, s3, b3, xs, ws, ss, bs, coef, tm):
    """h2: (N, M, C) bf16, xs: (N, M, Cin) bf16, weights bf16, scales f32,
    coef: (N, 1, 4C) f32 or None.  Returns relu(bn3(h2@w3)[*coef] + bns(xs@ws))."""
    n, m, c = h2.shape
    c4 = w3.shape[-1]
    cin = xs.shape[-1]
    in_specs = [
        pl.BlockSpec((1, tm, c), lambda i, j: (i, j, 0)),
        pl.BlockSpec((c, c4), lambda i, j: (0, 0)),
        pl.BlockSpec((1, c4), lambda i, j: (0, 0)),
        pl.BlockSpec((1, c4), lambda i, j: (0, 0)),
        pl.BlockSpec((1, tm, cin), lambda i, j: (i, j, 0)),
        pl.BlockSpec((cin, c4), lambda i, j: (0, 0)),
        pl.BlockSpec((1, c4), lambda i, j: (0, 0)),
        pl.BlockSpec((1, c4), lambda i, j: (0, 0)),
    ]
    args = [h2, w3, s3, b3, xs, ws, ss, bs]
    if coef is not None:
        in_specs.append(pl.BlockSpec((1, 1, c4), lambda i, j: (i, 0, 0)))
        args.append(coef)
    return pl.pallas_call(
        functools.partial(_tail_kernel, has_coef=coef is not None),
        out_shape=jax.ShapeDtypeStruct((n, m, c4), jnp.float32),
        grid=(n, pl.cdiv(m, tm)),
        in_specs=in_specs,
        out_specs=pl.BlockSpec((1, tm, c4), lambda i, j: (i, j, 0)),
        compiler_params=pltpu.CompilerParams(
            dimension_semantics=("parallel", "parallel"),
            vmem_limit_bytes=_VMEM_LIMIT,
        ),
    )(*args)


# ----------------------------- glue / wrapper -------------------------------


def fold_bn(bn):
    scale = bn["gamma"] / jnp.sqrt(bn["var"] + EPS)
    shift = bn["beta"] - bn["mean"] * scale
    return scale[None, :], shift[None, :]


def bottleneck_forward(params, x_nchw, strides, is_se=False):
    x = jnp.transpose(x_nchw, (0, 2, 3, 1)).astype(jnp.float32)  # NCHW -> NHWC
    n, h, w, cin = x.shape
    c = params["w1"].shape[1]
    c4 = 4 * c
    s = strides
    ho = (h - 1) // s + 1
    wo = (w - 1) // s + 1
    mo = ho * wo

    cast = lambda a: a.astype(jnp.bfloat16)   # bf16 MXU operands / intermediates
    tm_in = _pick_tile(h * w)
    tm_out = _pick_tile(mo)

    # conv1: 1x1, stride 1, fused BN + ReLU.
    s1, b1 = fold_bn(params["bn1"])
    h1 = matmul_bn_act(cast(x).reshape(n, h * w, cin), cast(params["w1"]),
                       s1, b1, "relu", jnp.bfloat16, tm_in)            # (n, h*w, c)

    # conv2: 3x3, stride s, pad 1.  The 9 taps are laid out once as an im2col
    # buffer with taps concatenated on the K/lane axis (bf16), so the kernel
    # issues a single (tm, 9C) x (9C, C) MXU dot per tile instead of 9 thin dots.
    # TODO(synk): halo tiling inside the kernel would remove the remaining im2col
    # duplication of h1 in HBM; kept in glue for lowering robustness.
    h1 = h1.reshape(n, h, w, c)
    xp = jnp.pad(h1, ((0, 0), (1, 1), (1, 1), (0, 0)))
    cols = jnp.concatenate(
        [xp[:, kh:kh + s * (ho - 1) + 1:s, kw:kw + s * (wo - 1) + 1:s, :]
         for kh in range(3) for kw in range(3)],
        axis=-1,
    ).reshape(n, mo, 9 * c)                                            # bf16
    s2, b2 = fold_bn(params["bn2"])
    h2 = matmul_bn_act(cols, cast(params["w2"].reshape(9 * c, c)),
                       s2, b2, "relu", jnp.bfloat16, tm_out)           # (n, mo, c)

    s3, b3 = fold_bn(params["bn3"])
    ss, bs = fold_bn(params["bns"])
    xs = cast(x[:, ::s, ::s, :].reshape(n, mo, cin))

    coef = None
    if is_se:
        # conv3+BN3 is affine per pixel, so mean_spatial(h3) == affine(mean_spatial(h2)):
        # the SE squeeze never needs h3 materialized.  The tiny SE MLP stays in glue.
        pooled_h2 = jnp.mean(h2.astype(jnp.float32), axis=1)           # (n, c)
        pooled_h3 = pooled_h2 @ params["w3"] * s3 + b3                 # (n, 4c)
        z = jax.nn.relu(pooled_h3 @ params["se_wc"] + params["se_bc"])
        coef = jax.nn.sigmoid(z @ params["se_we"] + params["se_be"])[:, None, :]

    # Fused tail: conv3 + BN3 + (SE coef) + shortcut conv/BN + residual + ReLU in
    # one pallas_call; h3 and the shortcut never round-trip through HBM.
    out = bottleneck_tail(h2, cast(params["w3"]), s3, b3,
                          xs, cast(params["ws"]), ss, bs, coef, tm_out)

    # TODO(synk): original PyTorch forward prints shortcut(x); print side-effect omitted.
    return jnp.transpose(out.reshape(n, ho, wo, c4), (0, 3, 1, 2))     # back to NCHW


# ----------------------------- pure-JAX reference ---------------------------


def bottleneck_ref(params, x_nchw, strides, is_se=False):
    x = jnp.transpose(x_nchw, (0, 2, 3, 1)).astype(jnp.float32)

    def bn(y, p):
        return (y - p["mean"]) / jnp.sqrt(p["var"] + EPS) * p["gamma"] + p["beta"]

    h1 = jax.nn.relu(bn(jnp.einsum("nhwi,io->nhwo", x, params["w1"]), params["bn1"]))
    h2 = jax.lax.conv_general_dilated(
        h1, params["w2"], (strides, strides), [(1, 1), (1, 1)],
        dimension_numbers=("NHWC", "HWIO", "NHWC"))
    h2 = jax.nn.relu(bn(h2, params["bn2"]))
    h3 = bn(jnp.einsum("nhwi,io->nhwo", h2, params["w3"]), params["bn3"])
    sc = bn(jnp.einsum("nhwi,io->nhwo", x[:, ::strides, ::strides, :], params["ws"]),
            params["bns"])
    if is_se:
        pooled = jnp.mean(h3, axis=(1, 2))
        z = jax.nn.relu(pooled @ params["se_wc"] + params["se_bc"])
        coef = jax.nn.sigmoid(z @ params["se_we"] + params["se_be"])
        h3 = h3 * coef[:, None, None, :]
    return jnp.transpose(jax.nn.relu(h3 + sc), (0, 3, 1, 2))


# ----------------------------- deterministic params -------------------------


def init_params(key, cin, c):
    c4 = 4 * c
    c_se = max(c4 // 16, 1)
    ks = jax.random.split(key, 12)

    def bn_params(k, ch):
        k1, k2, k3, k4 = jax.random.split(k, 4)
        return {
            "gamma": jax.random.uniform(k1, (ch,), jnp.float32, 0.5, 1.5),
            "beta": 0.1 * jax.random.normal(k2, (ch,), jnp.float32),
            "mean": 0.1 * jax.random.normal(k3, (ch,), jnp.float32),
            "var": jax.random.uniform(k4, (ch,), jnp.float32, 0.5, 1.5),
        }

    return {
        "w1": 0.3 * jax.random.normal(ks[0], (cin, c), jnp.float32),       # 1x1 conv (Cin, C)
        "bn1": bn_params(ks[1], c),
        "w2": 0.3 * jax.random.normal(ks[2], (3, 3, c, c), jnp.float32),   # 3x3 conv HWIO
        "bn2": bn_params(ks[3], c),
        "w3": 0.3 * jax.random.normal(ks[4], (c, c4), jnp.float32),        # 1x1 conv (C, 4C)
        "bn3": bn_params(ks[5], c4),
        "ws": 0.3 * jax.random.normal(ks[6], (cin, c4), jnp.float32),      # shortcut 1x1
        "bns": bn_params(ks[7], c4),
        "se_wc": 0.3 * jax.random.normal(ks[8], (c4, c_se), jnp.float32),
        "se_bc": 0.1 * jax.random.normal(ks[9], (c_se,), jnp.float32),
        "se_we": 0.3 * jax.random.normal(ks[10], (c_se, c4), jnp.float32),
        "se_be": 0.1 * jax.random.normal(ks[11], (c4,), jnp.float32),
    }


if __name__ == "__main__":
    key = jax.random.PRNGKey(0)
    kx, kp = jax.random.split(key)

    n, cin, h, w = 2, 4, 16, 16     # small NCHW input consistent with the module
    c, strides = 4, 2               # BottleNeck(in_channels=4, out_channels=4, strides=2)

    params = init_params(kp, cin, c)
    x = jax.random.normal(kx, (n, cin, h, w), jnp.float32)

    fwd = jax.jit(bottleneck_forward, static_argnums=(2, 3))

    ho = (h - 1) // strides + 1
    wo = (w - 1) // strides + 1
    for is_se in (False, True):
        out = jax.block_until_ready(fwd(params, x, strides, is_se))
        ref = bottleneck_ref(params, x, strides, is_se)
        assert out.shape == ref.shape == (n, 4 * c, ho, wo), (out.shape, ref.shape)
        err = float(jnp.max(jnp.abs(out - ref)))
        ref_max = float(jnp.max(jnp.abs(ref)))
        # bf16 MXU operands -> compare against the f32 reference with a bf16-level tolerance.
        assert err < 3e-2 * ref_max + 3e-2, (
            f"mismatch (is_se={is_se}): max abs err {err} (ref max {ref_max})")

    print("KERNEL_OK")
</pallas_src>

<mosaic_0001>
module attributes {stable_mosaic.version = 11 : i64} {
  func.func @_matmul_bn_act_kernel(%arg0: i32, %arg1: i32, %arg2: memref<1x256x4xbf16, #tpu.memory_space<vmem>>, %arg3: memref<4x4xbf16, #tpu.memory_space<vmem>>, %arg4: memref<1x4xf32, #tpu.memory_space<vmem>>, %arg5: memref<1x4xf32, #tpu.memory_space<vmem>>, %arg6: memref<1x256x4xbf16, #tpu.memory_space<vmem>>) attributes {dimension_semantics = [#tpu.dimension_semantics<parallel>, #tpu.dimension_semantics<parallel>], iteration_bounds = array<i64: 2, 1>, scalar_prefetch = 0 : i64, scratch_operands = 0 : i64, tpu.core_type = #tpu.core_type<tc>, window_params = [{transform_indices = @transform_0, window_bounds = array<i64: 1, 256, 4>}, {pipeline_mode = #tpu.pipeline_mode<synchronous>, transform_indices = @transform_1, window_bounds = array<i64: 4, 4>}, {pipeline_mode = #tpu.pipeline_mode<synchronous>, transform_indices = @transform_2, window_bounds = array<i64: 1, 4>}, {pipeline_mode = #tpu.pipeline_mode<synchronous>, transform_indices = @transform_3, window_bounds = array<i64: 1, 4>}, {transform_indices = @transform_4, window_bounds = array<i64: 1, 256, 4>}]} {
    %c0 = arith.constant 0 : index
    %c0_0 = arith.constant 0 : index
    %c0_1 = arith.constant 0 : index
    %0 = vector.load %arg2[%c0, %c0_0, %c0_1] : memref<1x256x4xbf16, #tpu.memory_space<vmem>>, vector<1x256x4xbf16>
    %1 = vector.shape_cast %0 : vector<1x256x4xbf16> to vector<256x4xbf16>
    %c0_2 = arith.constant 0 : index
    %c0_3 = arith.constant 0 : index
    %2 = vector.load %arg3[%c0_2, %c0_3] : memref<4x4xbf16, #tpu.memory_space<vmem>>, vector<4x4xbf16>
    %cst = arith.constant dense<0.000000e+00> : vector<256x4xf32>
    %3 = tpu.matmul %1, %2, %cst {dimension_numbers = #tpu.dot_dimension_numbers<[1], [0], [0], [1], [0, 0, 1, 1], [], []>} : vector<256x4xbf16>, vector<4x4xbf16>, vector<256x4xf32> -> vector<256x4xf32>
    %c0_4 = arith.constant 0 : index
    %c0_5 = arith.constant 0 : index
    %4 = vector.load %arg4[%c0_4, %c0_5] : memref<1x4xf32, #tpu.memory_space<vmem>>, vector<1x4xf32>
    %5 = vector.broadcast %4 : vector<1x4xf32> to vector<256x4xf32>
    %6 = arith.mulf %3, %5 : vector<256x4xf32>
    %c0_6 = arith.constant 0 : index
    %c0_7 = arith.constant 0 : index
    %7 = vector.load %arg5[%c0_6, %c0_7] : memref<1x4xf32, #tpu.memory_space<vmem>>, vector<1x4xf32>
    %8 = vector.broadcast %7 : vector<1x4xf32> to vector<256x4xf32>
    %9 = arith.addf %6, %8 : vector<256x4xf32>
    %cst_8 = arith.constant 0.000000e+00 : f32
    %10 = vector.broadcast %cst_8 : f32 to vector<256x4xf32>
    %11 = arith.maximumf %9, %10 : vector<256x4xf32>
    %12 = arith.truncf %11 : vector<256x4xf32> to vector<256x4xbf16>
    %c0_9 = arith.constant 0 : index
    %c0_10 = arith.constant 0 : index
    %c0_11 = arith.constant 0 : index
    %13 = vector.load %arg6[%c0_9, %c0_10, %c0_11] : memref<1x256x4xbf16, #tpu.memory_space<vmem>>, vector<1x256x4xbf16>
    %14 = vector.shape_cast %13 : vector<1x256x4xbf16> to vector<256x4xbf16>
    %15 = vector.shape_cast %12 : vector<256x4xbf16> to vector<1x256x4xbf16>
    tpu.vector_store %arg6[%c0_9, %c0_10, %c0_11], %15 {strides = array<i32>} : memref<1x256x4xbf16, #tpu.memory_space<vmem>>, vector<1x256x4xbf16>,
    return
  }
  func.func @transform_0(%arg0: i32, %arg1: i32) -> (i32, i32, i32) {
    %c0_i32 = arith.constant 0 : i32
    %c0_i32_0 = arith.constant 0 : i32
    return %arg0, %arg1, %c0_i32 : i32, i32, i32
  }
  func.func @transform_1(%arg0: i32, %arg1: i32) -> (i32, i32) {
    %c0_i32 = arith.constant 0 : i32
    %c0_i32_0 = arith.constant 0 : i32
    %c0_i32_1 = arith.constant 0 : i32
    return %c0_i32, %c0_i32_0 : i32, i32
  }
  func.func @transform_2(%arg0: i32, %arg1: i32) -> (i32, i32) {
    %c0_i32 = arith.constant 0 : i32
    %c0_i32_0 = arith.constant 0 : i32
    %c0_i32_1 = arith.constant 0 : i32
    return %c0_i32, %c0_i32_0 : i32, i32
  }
  func.func @transform_3(%arg0: i32, %arg1: i32) -> (i32, i32) {
    %c0_i32 = arith.constant 0 : i32
    %c0_i32_0 = arith.constant 0 : i32
    %c0_i32_1 = arith.constant 0 : i32
    return %c0_i32, %c0_i32_0 : i32, i32
  }
  func.func @transform_4(%arg0: i32, %arg1: i32) -> (i32, i32, i32) {
    %c0_i32 = arith.constant 0 : i32
    %c0_i32_0 = arith.constant 0 : i32
    return %arg0, %arg1, %c0_i32 : i32, i32, i32
  }
}

module attributes {stable_mosaic.version = 11 : i64} {
  func.func @_matmul_bn_act_kernel(%arg0: i32, %arg1: i32, %arg2: memref<1x64x36xbf16, #tpu.memory_space<vmem>>, %arg3: memref<36x4xbf16, #tpu.memory_space<vmem>>, %arg4: memref<1x4xf32, #tpu.memory_space<vmem>>, %arg5: memref<1x4xf32, #tpu.memory_space<vmem>>, %arg6: memref<1x64x4xbf16, #tpu.memory_space<vmem>>) attributes {dimension_semantics = [#tpu.dimension_semantics<parallel>, #tpu.dimension_semantics<parallel>], iteration_bounds = array<i64: 2, 1>, scalar_prefetch = 0 : i64, scratch_operands = 0 : i64, tpu.core_type = #tpu.core_type<tc>, window_params = [{transform_indices = @transform_0, window_bounds = array<i64: 1, 64, 36>}, {pipeline_mode = #tpu.pipeline_mode<synchronous>, transform_indices = @transform_1, window_bounds = array<i64: 36, 4>}, {pipeline_mode = #tpu.pipeline_mode<synchronous>, transform_indices = @transform_2, window_bounds = array<i64: 1, 4>}, {pipeline_mode = #tpu.pipeline_mode<synchronous>, transform_indices = @transform_3, window_bounds = array<i64: 1, 4>}, {transform_indices = @transform_4, window_bounds = array<i64: 1, 64, 4>}]} {
    %c0 = arith.constant 0 : index
    %c0_0 = arith.constant 0 : index
    %c0_1 = arith.constant 0 : index
    %0 = vector.load %arg2[%c0, %c0_0, %c0_1] : memref<1x64x36xbf16, #tpu.memory_space<vmem>>, vector<1x64x36xbf16>
    %1 = vector.shape_cast %0 : vector<1x64x36xbf16> to vector<64x36xbf16>
    %c0_2 = arith.constant 0 : index
    %c0_3 = arith.constant 0 : index
    %2 = vector.load %arg3[%c0_2, %c0_3] : memref<36x4xbf16, #tpu.memory_space<vmem>>, vector<36x4xbf16>
    %cst = arith.constant dense<0.000000e+00> : vector<64x4xf32>
    %3 = tpu.matmul %1, %2, %cst {dimension_numbers = #tpu.dot_dimension_numbers<[1], [0], [0], [1], [0, 0, 1, 1], [], []>} : vector<64x36xbf16>, vector<36x4xbf16>, vector<64x4xf32> -> vector<64x4xf32>
    %c0_4 = arith.constant 0 : index
    %c0_5 = arith.constant 0 : index
    %4 = vector.load %arg4[%c0_4, %c0_5] : memref<1x4xf32, #tpu.memory_space<vmem>>, vector<1x4xf32>
    %5 = vector.broadcast %4 : vector<1x4xf32> to vector<64x4xf32>
    %6 = arith.mulf %3, %5 : vector<64x4xf32>
    %c0_6 = arith.constant 0 : index
    %c0_7 = arith.constant 0 : index
    %7 = vector.load %arg5[%c0_6, %c0_7] : memref<1x4xf32, #tpu.memory_space<vmem>>, vector<1x4xf32>
    %8 = vector.broadcast %7 : vector<1x4xf32> to vector<64x4xf32>
    %9 = arith.addf %6, %8 : vector<64x4xf32>
    %cst_8 = arith.constant 0.000000e+00 : f32
    %10 = vector.broadcast %cst_8 : f32 to vector<64x4xf32>
    %11 = arith.maximumf %9, %10 : vector<64x4xf32>
    %12 = arith.truncf %11 : vector<64x4xf32> to vector<64x4xbf16>
    %c0_9 = arith.constant 0 : index
    %c0_10 = arith.constant 0 : index
    %c0_11 = arith.constant 0 : index
    %13 = vector.load %arg6[%c0_9, %c0_10, %c0_11] : memref<1x64x4xbf16, #tpu.memory_space<vmem>>, vector<1x64x4xbf16>
    %14 = vector.shape_cast %13 : vector<1x64x4xbf16> to vector<64x4xbf16>
    %15 = vector.shape_cast %12 : vector<64x4xbf16> to vector<1x64x4xbf16>
    tpu.vector_store %arg6[%c0_9, %c0_10, %c0_11], %15 {strides = array<i32>} : memref<1x64x4xbf16, #tpu.memory_space<vmem>>, vector<1x64x4xbf16>,
    return
  }
  func.func @transform_0(%arg0: i32, %arg1: i32) -> (i32, i32, i32) {
    %c0_i32 = arith.constant 0 : i32
    %c0_i32_0 = arith.constant 0 : i32
    return %arg0, %arg1, %c0_i32 : i32, i32, i32
  }
  func.func @transform_1(%arg0: i32, %arg1: i32) -> (i32, i32) {
    %c0_i32 = arith.constant 0 : i32
    %c0_i32_0 = arith.constant 0 : i32
    %c0_i32_1 = arith.constant 0 : i32
    return %c0_i32, %c0_i32_0 : i32, i32
  }
  func.func @transform_2(%arg0: i32, %arg1: i32) -> (i32, i32) {
    %c0_i32 = arith.constant 0 : i32
    %c0_i32_0 = arith.constant 0 : i32
    %c0_i32_1 = arith.constant 0 : i32
    return %c0_i32, %c0_i32_0 : i32, i32
  }
  func.func @transform_3(%arg0: i32, %arg1: i32) -> (i32, i32) {
    %c0_i32 = arith.constant 0 : i32
    %c0_i32_0 = arith.constant 0 : i32
    %c0_i32_1 = arith.constant 0 : i32
    return %c0_i32, %c0_i32_0 : i32, i32
  }
  func.func @transform_4(%arg0: i32, %arg1: i32) -> (i32, i32, i32) {
    %c0_i32 = arith.constant 0 : i32
    %c0_i32_0 = arith.constant 0 : i32
    return %arg0, %arg1, %c0_i32 : i32, i32, i32
  }
}

module attributes {stable_mosaic.version = 11 : i64} {
  func.func @_tail_kernel(%arg0: i32, %arg1: i32, %arg2: memref<1x64x4xbf16, #tpu.memory_space<vmem>>, %arg3: memref<4x16xbf16, #tpu.memory_space<vmem>>, %arg4: memref<1x16xf32, #tpu.memory_space<vmem>>, %arg5: memref<1x16xf32, #tpu.memory_space<vmem>>, %arg6: memref<1x64x4xbf16, #tpu.memory_space<vmem>>, %arg7: memref<4x16xbf16, #tpu.memory_space<vmem>>, %arg8: memref<1x16xf32, #tpu.memory_space<vmem>>, %arg9: memref<1x16xf32, #tpu.memory_space<vmem>>, %arg10: memref<1x64x16xf32, #tpu.memory_space<vmem>>) attributes {dimension_semantics = [#tpu.dimension_semantics<parallel>, #tpu.dimension_semantics<parallel>], iteration_bounds = array<i64: 2, 1>, scalar_prefetch = 0 : i64, scratch_operands = 0 : i64, tpu.core_type = #tpu.core_type<tc>, window_params = [{transform_indices = @transform_0, window_bounds = array<i64: 1, 64, 4>}, {pipeline_mode = #tpu.pipeline_mode<synchronous>, transform_indices = @transform_1, window_bounds = array<i64: 4, 16>}, {pipeline_mode = #tpu.pipeline_mode<synchronous>, transform_indices = @transform_2, window_bounds = array<i64: 1, 16>}, {pipeline_mode = #tpu.pipeline_mode<synchronous>, transform_indices = @transform_3, window_bounds = array<i64: 1, 16>}, {transform_indices = @transform_4, window_bounds = array<i64: 1, 64, 4>}, {pipeline_mode = #tpu.pipeline_mode<synchronous>, transform_indices = @transform_5, window_bounds = array<i64: 4, 16>}, {pipeline_mode = #tpu.pipeline_mode<synchronous>, transform_indices = @transform_6, window_bounds = array<i64: 1, 16>}, {pipeline_mode = #tpu.pipeline_mode<synchronous>, transform_indices = @transform_7, window_bounds = array<i64: 1, 16>}, {transform_indices = @transform_8, window_bounds = array<i64: 1, 64, 16>}]} {
    %c0 = arith.constant 0 : index
    %c0_0 = arith.constant 0 : index
    %c0_1 = arith.constant 0 : index
    %0 = vector.load %arg2[%c0, %c0_0, %c0_1] : memref<1x64x4xbf16, #tpu.memory_space<vmem>>, vector<1x64x4xbf16>
    %1 = vector.shape_cast %0 : vector<1x64x4xbf16> to vector<64x4xbf16>
    %c0_2 = arith.constant 0 : index
    %c0_3 = arith.constant 0 : index
    %2 = vector.load %arg3[%c0_2, %c0_3] : memref<4x16xbf16, #tpu.memory_space<vmem>>, vector<4x16xbf16>
    %cst = arith.constant dense<0.000000e+00> : vector<64x16xf32>
    %3 = tpu.matmul %1, %2, %cst {dimension_numbers = #tpu.dot_dimension_numbers<[1], [0], [0], [1], [0, 0, 1, 1], [], []>} : vector<64x4xbf16>, vector<4x16xbf16>, vector<64x16xf32> -> vector<64x16xf32>
    %c0_4 = arith.constant 0 : index
    %c0_5 = arith.constant 0 : index
    %4 = vector.load %arg4[%c0_4, %c0_5] : memref<1x16xf32, #tpu.memory_space<vmem>>, vector<1x16xf32>
    %5 = vector.broadcast %4 : vector<1x16xf32> to vector<64x16xf32>
    %6 = arith.mulf %3, %5 : vector<64x16xf32>
    %c0_6 = arith.constant 0 : index
    %c0_7 = arith.constant 0 : index
    %7 = vector.load %arg5[%c0_6, %c0_7] : memref<1x16xf32, #tpu.memory_space<vmem>>, vector<1x16xf32>
    %8 = vector.broadcast %7 : vector<1x16xf32> to vector<64x16xf32>
    %9 = arith.addf %6, %8 : vector<64x16xf32>
    %c0_8 = arith.constant 0 : index
    %c0_9 = arith.constant 0 : index
    %c0_10 = arith.constant 0 : index
    %10 = vector.load %arg6[%c0_8, %c0_9, %c0_10] : memref<1x64x4xbf16, #tpu.memory_space<vmem>>, vector<1x64x4xbf16>
    %11 = vector.shape_cast %10 : vector<1x64x4xbf16> to vector<64x4xbf16>
    %c0_11 = arith.constant 0 : index
    %c0_12 = arith.constant 0 : index
    %12 = vector.load %arg7[%c0_11, %c0_12] : memref<4x16xbf16, #tpu.memory_space<vmem>>, vector<4x16xbf16>
    %cst_13 = arith.constant dense<0.000000e+00> : vector<64x16xf32>
    %13 = tpu.matmul %11, %12, %cst_13 {dimension_numbers = #tpu.dot_dimension_numbers<[1], [0], [0], [1], [0, 0, 1, 1], [], []>} : vector<64x4xbf16>, vector<4x16xbf16>, vector<64x16xf32> -> vector<64x16xf32>
    %c0_14 = arith.constant 0 : index
    %c0_15 = arith.constant 0 : index
    %14 = vector.load %arg8[%c0_14, %c0_15] : memref<1x16xf32, #tpu.memory_space<vmem>>, vector<1x16xf32>
    %15 = vector.broadcast %14 : vector<1x16xf32> to vector<64x16xf32>
    %16 = arith.mulf %13, %15 : vector<64x16xf32>
    %c0_16 = arith.constant 0 : index
    %c0_17 = arith.constant 0 : index
    %17 = vector.load %arg9[%c0_16, %c0_17] : memref<1x16xf32, #tpu.memory_space<vmem>>, vector<1x16xf32>
    %18 = vector.broadcast %17 : vector<1x16xf32> to vector<64x16xf32>
    %19 = arith.addf %16, %18 : vector<64x16xf32>
    %20 = arith.addf %9, %19 : vector<64x16xf32>
    %cst_18 = arith.constant 0.000000e+00 : f32
    %21 = vector.broadcast %cst_18 : f32 to vector<64x16xf32>
    %22 = arith.maximumf %20, %21 : vector<64x16xf32>
    %c0_19 = arith.constant 0 : index
    %c0_20 = arith.constant 0 : index
    %c0_21 = arith.constant 0 : index
    %23 = vector.load %arg10[%c0_19, %c0_20, %c0_21] : memref<1x64x16xf32, #tpu.memory_space<vmem>>, vector<1x64x16xf32>
    %24 = vector.shape_cast %23 : vector<1x64x16xf32> to vector<64x16xf32>
    %25 = vector.shape_cast %22 : vector<64x16xf32> to vector<1x64x16xf32>
    tpu.vector_store %arg10[%c0_19, %c0_20, %c0_21], %25 {strides = array<i32>} : memref<1x64x16xf32, #tpu.memory_space<vmem>>, vector<1x64x16xf32>,
    return
  }
  func.func @transform_0(%arg0: i32, %arg1: i32) -> (i32, i32, i32) {
    %c0_i32 = arith.constant 0 : i32
    %c0_i32_0 = arith.constant 0 : i32
    return %arg0, %arg1, %c0_i32 : i32, i32, i32
  }
  func.func @transform_1(%arg0: i32, %arg1: i32) -> (i32, i32) {
    %c0_i32 = arith.constant 0 : i32
    %c0_i32_0 = arith.constant 0 : i32
    %c0_i32_1 = arith.constant 0 : i32
    return %c0_i32, %c0_i32_0 : i32, i32
  }
  func.func @transform_2(%arg0: i32, %arg1: i32) -> (i32, i32) {
    %c0_i32 = arith.constant 0 : i32
    %c0_i32_0 = arith.constant 0 : i32
    %c0_i32_1 = arith.constant 0 : i32
    return %c0_i32, %c0_i32_0 : i32, i32
  }
  func.func @transform_3(%arg0: i32, %arg1: i32) -> (i32, i32) {
    %c0_i32 = arith.constant 0 : i32
    %c0_i32_0 = arith.constant 0 : i32
    %c0_i32_1 = arith.constant 0 : i32
    return %c0_i32, %c0_i32_0 : i32, i32
  }
  func.func @transform_4(%arg0: i32, %arg1: i32) -> (i32, i32, i32) {
    %c0_i32 = arith.constant 0 : i32
    %c0_i32_0 = arith.constant 0 : i32
    return %arg0, %arg1, %c0_i32 : i32, i32, i32
  }
  func.func @transform_5(%arg0: i32, %arg1: i32) -> (i32, i32) {
    %c0_i32 = arith.constant 0 : i32
    %c0_i32_0 = arith.constant 0 : i32
    %c0_i32_1 = arith.constant 0 : i32
    return %c0_i32, %c0_i32_0 : i32, i32
  }
  func.func @transform_6(%arg0: i32, %arg1: i32) -> (i32, i32) {
    %c0_i32 = arith.constant 0 : i32
    %c0_i32_0 = arith.constant 0 : i32
    %c0_i32_1 = arith.constant 0 : i32
    return %c0_i32, %c0_i32_0 : i32, i32
  }
  func.func @transform_7(%arg0: i32, %arg1: i32) -> (i32, i32) {
    %c0_i32 = arith.constant 0 : i32
    %c0_i32_0 = arith.constant 0 : i32
    %c0_i32_1 = arith.constant 0 : i32
    return %c0_i32, %c0_i32_0 : i32, i32
  }
  func.func @transform_8(%arg0: i32, %arg1: i32) -> (i32, i32, i32) {
    %c0_i32 = arith.constant 0 : i32
    %c0_i32_0 = arith.constant 0 : i32
    return %arg0, %arg1, %c0_i32 : i32, i32, i32
  }
}

</mosaic_0001>

<llo_original>
// kernel: bottleneck_forward.4
$region0: #{bottleneck_forward.4}
  #allocation0 [shape = 'u32[]', space=smem, size = 0x4, offset = 0x4, fixed_abs, tag = 'smem constant byte address 0x4 - core index']
  #allocation1 [shape = 'u32[72,128]{1,0:T(1,128)}', space=vmem, size = 0x9000, scoped, tag = 'internal scratch']
  %s0 = inlined_call_operand.vmem [shape: bf16[2,64,36], index: 0, kind: input, shape index: {}]
  %s1 = inlined_call_operand.vmem [shape: bf16[36,4], index: 1, kind: input, shape index: {}]
  %s2 = inlined_call_operand.vmem [shape: f32[1,4], index: 2, kind: input, shape index: {}]
  %s3 = inlined_call_operand.vmem [shape: f32[1,4], index: 3, kind: input, shape index: {}]
  %s4 = inlined_call_operand.vmem [shape: bf16[2,64,4], index: 4, kind: output, shape index: {}]
  %s5 = sld [smem:[#allocation0]]
  $region49: #{bottleneck_forward.4} parent=0
    _
  %s7 = ssub.s32 1, %s5
  %s8 = scalar_select 0, %s7, %s5
  loop: start=0, step=1, limit=4
  $region2: #{bottleneck_forward.4} parent=0 // loop_pre_header
    _
  $region3: #{bottleneck_forward.4} parent=0 // loop_header
    %s10 = sphi 0, %s14
    %p11 = scmp.ge.s32.totalorder %s10, 4
    %s17 = sphi 0, %s29
    %s18 = sphi 0, %s25
    %s19 = sphi 0, %s17
    %s20 = sphi 0, %s18
    %s21 = sphi 0, %s19
    %s22 = sphi 0, %s20
    %s34 = sphi 0, %s36
    %s37 = sphi 0, %s34
    %s38 = sphi 0, %s37
    %s54 = sphi 0, %s38
    %s58 = sphi 0, %s58
    %s60 = sphi 0, %s58
    %s61 = sphi 0, %s60
    %s75 = sphi 0, %s61
    %s79 = sphi 0, %s79
    %s81 = sphi 0, %s79
    %s82 = sphi 0, %s81
    %s96 = sphi 0, %s82
    %s100 = sphi 0, %s100
    %s102 = sphi 0, %s100
    %s103 = sphi 0, %s102
    %s117 = sphi 0, %s103
    %s125 = sphi 0, %s127
    %s128 = sphi 0, %s125
    %s129 = sphi 0, %s128
    %s145 = sphi 0, %s129
  $region4: #{bottleneck_forward.4} parent=0 // loop_header_branch
    %13 = sbr.rel (%p11) target = $region8
  $region5: #{bottleneck_forward.4} parent=0 // loop_body
    %s15 = ssub.s32 %s10, 1
    %s16 = ssub.s32 %s10, 2
    %s23 = sadd.s32 1, %s18
    %p24 = scmp.ge.s32.totalorder %s23, 1
    %s25 = scalar_select %p24, 0, %s23
    %s26 = sadd.s32 1, %s17
    %s27 = scalar_select %p24, %s26, %s17
    %p28 = scmp.ge.s32.totalorder %s27, 2
    %s29 = scalar_select %p28, 0, %s27
    %s30 = ssub.s32 %s17, %s29
    %s31 = ssub.s32 %s18, %s25
    %s32 = sor.u32 %s30, %s31
    %p33 = scmp.eq.s32.totalorder %s32, 0
    %s35 = sadd.s32 %s34, 1
    %s36 = scalar_select %p33, %s34, %s35
    %p39 = pneg %p33
    %p40 = scmp.eq.s32.totalorder %s10, 1
    %p41 = por %p39, %p40
    %p42 = scmp.ne.s32.totalorder %s34, %s37
    %p43 = scmp.eq.s32.totalorder %s10, 0
    %p44 = por %p42, %p43
    %p45 = scmp.ne.s32.totalorder %s34, %s37
    %p46 = scmp.eq.s32.totalorder %s15, 1
    %p47 = por %p45, %p46
    %p48 = scmp.ne.s32.totalorder %s37, %s38
    %p49 = scmp.eq.s32.totalorder %s15, 0
    %p50 = por %p48, %p49
    %p51 = scmp.ne.s32.totalorder %s37, %s38
    %p52 = scmp.eq.s32.totalorder %s16, 1
    %p53 = por %p51, %p52
    %p55 = scmp.ne.s32.totalorder %s38, %s54
    %p56 = scmp.eq.s32.totalorder %s16, 0
    %p57 = por %p55, %p56
    %s59 = sadd.s32 %s58, 1
    %p62 = scmp.eq.s32.totalorder %s10, 1
    %p63 = scmp.ne.s32.totalorder %s58, %s60
    %p64 = scmp.eq.s32.totalorder %s10, 0
    %p65 = por %p63, %p64
    %p66 = scmp.ne.s32.totalorder %s58, %s60
    %p67 = scmp.eq.s32.totalorder %s15, 1
    %p68 = por %p66, %p67
    %p69 = scmp.ne.s32.totalorder %s60, %s61
    %p70 = scmp.eq.s32.totalorder %s15, 0
    %p71 = por %p69, %p70
    %p72 = scmp.ne.s32.totalorder %s60, %s61
    %p73 = scmp.eq.s32.totalorder %s16, 1
    %p74 = por %p72, %p73
    %p76 = scmp.ne.s32.totalorder %s61, %s75
    %p77 = scmp.eq.s32.totalorder %s16, 0
    %p78 = por %p76, %p77
    %s80 = sadd.s32 %s79, 1
    %p83 = scmp.eq.s32.totalorder %s10, 1
    %p84 = scmp.ne.s32.totalorder %s79, %s81
    %p85 = scmp.eq.s32.totalorder %s10, 0
    %p86 = por %p84, %p85
    %p87 = scmp.ne.s32.totalorder %s79, %s81
    %p88 = scmp.eq.s32.totalorder %s15, 1
    %p89 = por %p87, %p88
    %p90 = scmp.ne.s32.totalorder %s81, %s82
    %p91 = scmp.eq.s32.totalorder %s15, 0
    %p92 = por %p90, %p91
    %p93 = scmp.ne.s32.totalorder %s81, %s82
    %p94 = scmp.eq.s32.totalorder %s16, 1
    %p95 = por %p93, %p94
    %p97 = scmp.ne.s32.totalorder %s82, %s96
    %p98 = scmp.eq.s32.totalorder %s16, 0
    %p99 = por %p97, %p98
    %s101 = sadd.s32 %s100, 1
    %p104 = scmp.eq.s32.totalorder %s10, 1
    %p105 = scmp.ne.s32.totalorder %s100, %s102
    %p106 = scmp.eq.s32.totalorder %s10, 0
    %p107 = por %p105, %p106
    %p108 = scmp.ne.s32.totalorder %s100, %s102
    %p109 = scmp.eq.s32.totalorder %s15, 1
    %p110 = por %p108, %p109
    %p111 = scmp.ne.s32.totalorder %s102, %s103
    %p112 = scmp.eq.s32.totalorder %s15, 0
    %p113 = por %p111, %p112
    %p114 = scmp.ne.s32.totalorder %s102, %s103
    %p115 = scmp.eq.s32.totalorder %s16, 1
    %p116 = por %p114, %p115
    %p118 = scmp.ne.s32.totalorder %s103, %s117
    %p119 = scmp.eq.s32.totalorder %s16, 0
    %p120 = por %p118, %p119
    %s121 = ssub.s32 %s17, %s29
    %s122 = ssub.s32 %s18, %s25
    %s123 = sor.u32 %s121, %s122
    %p124 = scmp.eq.s32.totalorder %s123, 0
    %s126 = sadd.s32 %s125, 1
    %s127 = scalar_select %p124, %s125, %s126
    %p130 = pneg %p124
    %p131 = scmp.eq.s32.totalorder %s10, 1
    %p132 = por %p130, %p131
    %p133 = scmp.ne.s32.totalorder %s125, %s128
    %p134 = scmp.eq.s32.totalorder %s10, 0
    %p135 = por %p133, %p134
    %p136 = scmp.ne.s32.totalorder %s125, %s128
    %p137 = scmp.eq.s32.totalorder %s15, 1
    %p138 = por %p136, %p137
    %p139 = scmp.ne.s32.totalorder %s128, %s129
    %p140 = scmp.eq.s32.totalorder %s15, 0
    %p141 = por %p139, %p140
    %p142 = scmp.ne.s32.totalorder %s128, %s129
    %p143 = scmp.eq.s32.totalorder %s16, 1
    %p144 = por %p142, %p143
    %p146 = scmp.ne.s32.totalorder %s129, %s145
    %p147 = scmp.eq.s32.totalorder %s16, 0
    %p148 = por %p146, %p147
    %p149 = scmp.le.s32.totalorder 1, %s10
    %p150 = scmp.lt.s32.totalorder %s10, 3
    %p151 = pnand %p149, %p150
    %p152 = pneg %p151
    // Predicated region
    $region9: #{bottleneck_forward.4} parent=5 // pred_check
      _
    $region10: #{bottleneck_forward.4} parent=5 // pred_check_branch
      %154 = sbr.rel (%p151) target = $region12
    $region11: #{bottleneck_forward.4} parent=5 // pred_region
      %s155 = ssub.s32 %s10, 1
      // Predicated region
      $region13: #{bottleneck_forward.4} parent=11 // pred_check
        %p156 = pneg %p71
      $region14: #{bottleneck_forward.4} parent=11 // pred_check_branch
        %158 = sbr.rel (%p156) target = $region16
      $region15: #{bottleneck_forward.4} parent=11 // pred_region
        _
      $region16: #{bottleneck_forward.4} parent=11 // pred_fallthru
        _
      // Predicated region
      $region17: #{bottleneck_forward.4} parent=11 // pred_check
        %p159 = pneg %p92
      $region18: #{bottleneck_forward.4} parent=11 // pred_check_branch
        %161 = sbr.rel (%p159) target = $region20
      $region19: #{bottleneck_forward.4} parent=11 // pred_region
        _
      $region20: #{bottleneck_forward.4} parent=11 // pred_fallthru
        _
      // Predicated region
      $region21: #{bottleneck_forward.4} parent=11 // pred_check
        %p162 = pneg %p113
      $region22: #{bottleneck_forward.4} parent=11 // pred_check_branch
        %164 = sbr.rel (%p162) target = $region24
      $region23: #{bottleneck_forward.4} parent=11 // pred_region
        _
      $region24: #{bottleneck_forward.4} parent=11 // pred_fallthru
        _
    $region12: #{bottleneck_forward.4} parent=5 // pred_fallthru
      _
    %p165 = scmp.lt.s32.totalorder %s10, 2
    // Predicated region
    $region25: #{bottleneck_forward.4} parent=5 // pred_check
      %p166 = pneg %p165
    $region26: #{bottleneck_forward.4} parent=5 // pred_check_branch
      %168 = sbr.rel (%p166) target = $region28
    $region27: #{bottleneck_forward.4} parent=5 // pred_region
      // Predicated region
      $region29: #{bottleneck_forward.4} parent=27 // pred_check
        %p169 = pneg %p44
      $region30: #{bottleneck_forward.4} parent=27 // pred_check_branch
        %171 = sbr.rel (%p169) target = $region32
      $region31: #{bottleneck_forward.4} parent=27 // pred_region
        %s172 = smul.u32 8, %s18
        %p173 = scmp.lt.s32.totalorder %s17, 1
        %s174 = scalar_select %p173, %s17, 1
        %p175 = scmp.lt.s32.totalorder %s172, 7
        %s176 = scalar_select %p175, %s172, 7
        %s177 = smul.addr %s174, 8
        %s178 = sadd.s32 %s176, %s177
        %s179 = smul.addr %s178, 4
        %s180 = scalar_lea.vmem %s0, %s179
        %s181 = smul.u32 8, %s18
      $region32: #{bottleneck_forward.4} parent=27 // pred_fallthru
        _
    $region28: #{bottleneck_forward.4} parent=5 // pred_fallthru
      _
    %p182 = scmp.le.s32.totalorder 1, %s10
    %p183 = scmp.lt.s32.totalorder %s10, 3
    %p184 = pnand %p182, %p183
    %p185 = pneg %p184
    // Predicated region
    $region33: #{bottleneck_forward.4} parent=5 // pred_check
      _
    $region34: #{bottleneck_forward.4} parent=5 // pred_check_branch
      %187 = sbr.rel (%p184) target = $region36
    $region35: #{bottleneck_forward.4} parent=5 // pred_region
      %s188 = ssub.s32 %s10, 1
      %s189 = smul.u32 8, %s20
      %p190 = scmp.lt.s32.totalorder %s19, 1
      %s191 = scalar_select %p190, %s19, 1
      %p192 = scmp.lt.s32.totalorder %s189, 7
      %s193 = scalar_select %p192, %s189, 7
      %s194 = smul.addr %s191, 8
      %s195 = sadd.s32 %s193, %s194
      %s196 = smul.addr %s195, 4
      %s197 = scalar_lea.vmem %s0, %s196
      %p198 = pneg %p50
      %p199 = pneg %p47
      %p200 = pneg %p71
      %p201 = pneg %p68
      %p202 = pneg %p92
      %p203 = pneg %p89
      %p204 = pneg %p113
      %p205 = pneg %p110
      %p206 = pneg %p141
      %p207 = pneg %p138
      %s208 = smul.u32 8, %s20
      %p209 = scmp.lt.s32.totalorder %s19, 1
      %s210 = scalar_select %p209, %s19, 1
      %p211 = scmp.lt.s32.totalorder %s208, 7
      %s212 = scalar_select %p211, %s208, 7
      %s213 = smul.addr %s210, 8
      %s214 = sadd.s32 %s212, %s213
      %s215 = smul.addr %s214, 4
      %s216 = scalar_lea.vmem %s4, %s215
      %s217 = smul.u32 8, %s20
      %p218 = scmp.lt.s32.totalorder %s19, 1
      %s219 = scalar_select %p218, %s19, 1
      %p220 = scmp.lt.s32.totalorder %s217, 7
      %s221 = scalar_select %p220, %s217, 7
      %s222 = smul.addr %s219, 8
      %s223 = sadd.s32 %s221, %s222
      %s224 = smul.addr %s223, 4
      %s225 = scalar_lea.vmem %s0, %s224
      %s226 = smul.u32 8, %s20
      %s227 = smul.u32 8, %s20
      %p228 = scmp.lt.s32.totalorder %s19, 1
      %s229 = scalar_select %p228, %s19, 1
      %p230 = scmp.lt.s32.totalorder %s227, 7
      %s231 = scalar_select %p230, %s227, 7
      %s232 = smul.addr %s229, 8
      %s233 = sadd.s32 %s231, %s232
      %s234 = smul.addr %s233, 4
      %s235 = scalar_lea.vmem %s4, %s234
      %s236 = smul.u32 8, %s20
      %v238 = vld [vmem:[%s225] sm:$0xf]
      %v239 = vld [vmem:[%s225 + $0x4] sm:$0xf]
      %v240 = vld [vmem:[%s225 + $0x8] sm:$0xf]
      %v241 = vld [vmem:[%s225 + $0xc] sm:$0xf]
      %v242 = vld [vmem:[%s225 + $0x10] sm:$0xf]
      %v243 = vld [vmem:[%s225 + $0x14] sm:$0xf]
      %v244 = vld [vmem:[%s225 + $0x18] sm:$0xf]
      %v245 = vld [vmem:[%s225 + $0x1c] sm:$0xf]
      %v246 = vld [vmem:[%s1] sm:$0xf]
      %v247 = vld [vmem:[%s1 + $0x4] sm:$0xf]
      %v248 = vld [vmem:[%s1 + $0x8] sm:$0xf]
      %v249 = vld [vmem:[%s1 + $0xc] sm:$0xf]
      %v250 = vld [vmem:[%s1 + $0x10] sm:$0x3]
      %v259 = vunpack.c.l.b16 %v238
      %v260 = vunpack.c.l.b16 %v239
      %v261 = vunpack.c.l.b16 %v240
      %v262 = vunpack.c.l.b16 %v241
      %v263 = vunpack.c.l.b16 %v242
      %v264 = vunpack.c.l.b16 %v243
      %v265 = vunpack.c.l.b16 %v244
      %v266 = vunpack.c.l.b16 %v245
      %v267 = vpack.c.b16 %v260, %v259
      %v268 = vpack.c.b16 %v262, %v261
      %v269 = vpack.c.b16 %v264, %v263
      %v270 = vpack.c.b16 %v266, %v265
      %v276 = vunpack.c.l.b16 %v246
      %v277 = vunpack.c.l.b16 %v247
      %v278 = vunpack.c.l.b16 %v248
      %v279 = vunpack.c.l.b16 %v249
      %v280 = vunpack.c.l.b16 %v250
      %v281 = vpack.c.b16 %v277, %v276
      %v282 = vpack.c.b16 %v279, %v278
      %v283 = vpack.c.b16 %v280, %v280
      %vm286 = vcmask 293888
      %v288 = vsel %vm286, %v267, 0
      %v291 = vsel %vm286, %v268, 0
      %v294 = vsel %vm286, %v269, 0
      %v297 = vsel %vm286, %v270, 0
      %vm299 = vcmask 1041408
      %v301 = vsel %vm299, %v283, 0
      %303 = vmatpush.bf16.msra.mxu0 0
      %304 = vmatpush.bf16.msra.mxu0 0
      %305 = vmatpush.bf16.msra.mxu0 0
      %306 = vmatpush.bf16.msra.mxu0 0
      %307 = vmatpush.bf16.msra.mxu0 0
      %308 = vmatpush.bf16.msra.mxu0 %v301
      %309 = vmatpush.bf16.msra.mxu0 %v282
      %310 = vmatpush.bf16.msra.mxu0 %v281
      %311 = vmatmul.bf16.gmra.mxu0 %v288
      %v312 = vpop.f32.mrf.mxu0
      %v313 = vadd.f32 0.0, %v312
      %v314 = vpop.f32.mrf.mxu0
      %v315 = vadd.f32 0.0, %v314
      %316 = vmatmul.bf16.gmra.mxu0 %v291
      %v317 = vpop.f32.mrf.mxu0
      %v318 = vadd.f32 0.0, %v317
      %v319 = vpop.f32.mrf.mxu0
      %v320 = vadd.f32 0.0, %v319
      %321 = vmatmul.bf16.gmra.mxu0 %v294
      %v322 = vpop.f32.mrf.mxu0
      %v323 = vadd.f32 0.0, %v322
      %v324 = vpop.f32.mrf.mxu0
      %v325 = vadd.f32 0.0, %v324
      %326 = vmatmul.bf16.gmra.mxu0 %v297
      %v327 = vpop.f32.mrf.mxu0
      %v328 = vadd.f32 0.0, %v327
      %v329 = vpop.f32.mrf.mxu0
      %v330 = vadd.f32 0.0, %v329
      %331 = vdwg.mxu0
      %v332 = vld [vmem:[%s2] sm:$0x1]
      %v334 = vperm.slane %v332, 0
      %v336 = vmul.f32 %v313, %v334
      %v337 = vmul.f32 %v315, %v334
      %v338 = vmul.f32 %v318, %v334
      %v339 = vmul.f32 %v320, %v334
      %v340 = vmul.f32 %v323, %v334
      %v341 = vmul.f32 %v325, %v334
      %v342 = vmul.f32 %v328, %v334
      %v343 = vmul.f32 %v330, %v334
      %v344 = vld [vmem:[%s3] sm:$0x1]
      %v346 = vperm.slane %v344, 0
      %v348 = vadd.f32 %v336, %v346
      %v349 = vadd.f32 %v337, %v346
      %v350 = vadd.f32 %v338, %v346
      %v351 = vadd.f32 %v339, %v346
      %v352 = vadd.f32 %v340, %v346
      %v353 = vadd.f32 %v341, %v346
      %v354 = vadd.f32 %v342, %v346
      %v355 = vadd.f32 %v343, %v346
      %v356 = vmax.f32 %v348, 0.0
      %v357 = vmax.f32 %v349, 0.0
      %v358 = vmax.f32 %v350, 0.0
      %v359 = vmax.f32 %v351, 0.0
      %v360 = vmax.f32 %v352, 0.0
      %v361 = vmax.f32 %v353, 0.0
      %v362 = vmax.f32 %v354, 0.0
      %v363 = vmax.f32 %v355, 0.0
      %v364 = vpack.c.bf16 %v356, %v356
      %v365 = vpack.c.bf16 %v357, %v357
      %v366 = vpack.c.bf16 %v358, %v358
      %v367 = vpack.c.bf16 %v359, %v359
      %v368 = vpack.c.bf16 %v360, %v360
      %v369 = vpack.c.bf16 %v361, %v361
      %v370 = vpack.c.bf16 %v362, %v362
      %v371 = vpack.c.bf16 %v363, %v363
      %vm372 = vcmask 27648
      %373 = vst.msk [vmem:[%s235] sm:$0xf] %vm372, %v364
      %374 = vst.msk [vmem:[%s235 + $0x4] sm:$0xf] %vm372, %v365
      %375 = vst.msk [vmem:[%s235 + $0x8] sm:$0xf] %vm372, %v366
      %376 = vst.msk [vmem:[%s235 + $0xc] sm:$0xf] %vm372, %v367
      %377 = vst.msk [vmem:[%s235 + $0x10] sm:$0xf] %vm372, %v368
      %378 = vst.msk [vmem:[%s235 + $0x14] sm:$0xf] %vm372, %v369
      %379 = vst.msk [vmem:[%s235 + $0x18] sm:$0xf] %vm372, %v370
      %380 = vst.msk [vmem:[%s235 + $0x1c] sm:$0xf] %vm372, %v371
      %s381 = smul.u32 8, %s20
      %p382 = scmp.lt.s32.totalorder %s19, 1
      %s383 = scalar_select %p382, %s19, 1
      %p384 = scmp.lt.s32.totalorder %s381, 7
      %s385 = scalar_select %p384, %s381, 7
      %s386 = smul.addr %s383, 8
      %s387 = sadd.s32 %s385, %s386
      %s388 = smul.addr %s387, 4
      %s389 = scalar_lea.vmem %s4, %s388
      // Predicated region
      $region37: #{bottleneck_forward.4} parent=35 // pred_check
        %p390 = pneg %p138
      $region38: #{bottleneck_forward.4} parent=35 // pred_check_branch
        %392 = sbr.rel (%p390) target = $region40
      $region39: #{bottleneck_forward.4} parent=35 // pred_region
        %s393 = smul.u32 8, %s20
      $region40: #{bottleneck_forward.4} parent=35 // pred_fallthru
        _
    $region36: #{bottleneck_forward.4} parent=5 // pred_fallthru
      _
    %p394 = scmp.le.s32.totalorder 2, %s10
    // Predicated region
    $region41: #{bottleneck_forward.4} parent=5 // pred_check
      %p395 = pneg %p394
    $region42: #{bottleneck_forward.4} parent=5 // pred_check_branch
      %397 = sbr.rel (%p395) target = $region44
    $region43: #{bottleneck_forward.4} parent=5 // pred_region
      %s398 = ssub.s32 %s10, 2
      // Predicated region
      $region45: #{bottleneck_forward.4} parent=43 // pred_check
        %p399 = pneg %p144
      $region46: #{bottleneck_forward.4} parent=43 // pred_check_branch
        %401 = sbr.rel (%p399) target = $region48
      $region47: #{bottleneck_forward.4} parent=43 // pred_region
        %s402 = smul.u32 8, %s22
        %p403 = scmp.lt.s32.totalorder %s21, 1
        %s404 = scalar_select %p403, %s21, 1
        %p405 = scmp.lt.s32.totalorder %s402, 7
        %s406 = scalar_select %p405, %s402, 7
        %s407 = smul.addr %s404, 8
        %s408 = sadd.s32 %s406, %s407
        %s409 = smul.addr %s408, 4
        %s410 = scalar_lea.vmem %s4, %s409
      $region48: #{bottleneck_forward.4} parent=43 // pred_fallthru
        _
    $region44: #{bottleneck_forward.4} parent=5 // pred_fallthru
      _
  $region6: #{bottleneck_forward.4} parent=0 // loop_footer
    %s14 = sadd.s32 1, %s10
  $region7: #{bottleneck_forward.4} parent=0 // loop_footer_branch
    %9 = sbr.rel target = $region3
  $region8: #{bottleneck_forward.4} parent=0 // loop_exit
    _

// kernel: bottleneck_forward.3
$region0: #{bottleneck_forward.3}
  #allocation0 [shape = 'u32[]', space=smem, size = 0x4, offset = 0x4, fixed_abs, tag = 'smem constant byte address 0x4 - core index']
  #allocation1 [shape = 'u32[72,128]{1,0:T(1,128)}', space=vmem, size = 0x9000, scoped, tag = 'internal scratch']
  %s0 = inlined_call_operand.vmem [shape: bf16[2,256,4], index: 0, kind: input, shape index: {}]
  %s1 = inlined_call_operand.vmem [shape: bf16[4,4], index: 1, kind: input, shape index: {}]
  %s2 = inlined_call_operand.vmem [shape: f32[1,4], index: 2, kind: input, shape index: {}]
  %s3 = inlined_call_operand.vmem [shape: f32[1,4], index: 3, kind: input, shape index: {}]
  %s4 = inlined_call_operand.vmem [shape: bf16[2,256,4], index: 4, kind: output, shape index: {}]
  %s5 = sld [smem:[#allocation0]]
  $region49: #{bottleneck_forward.3} parent=0
    _
  %s7 = ssub.s32 1, %s5
  %s8 = scalar_select 0, %s7, %s5
  loop: start=0, step=1, limit=4
  $region2: #{bottleneck_forward.3} parent=0 // loop_pre_header
    _
  $region3: #{bottleneck_forward.3} parent=0 // loop_header
    %s10 = sphi 0, %s14
    %p11 = scmp.ge.s32.totalorder %s10, 4
    %s17 = sphi 0, %s29
    %s18 = sphi 0, %s25
    %s19 = sphi 0, %s17
    %s20 = sphi 0, %s18
    %s21 = sphi 0, %s19
    %s22 = sphi 0, %s20
    %s34 = sphi 0, %s36
    %s37 = sphi 0, %s34
    %s38 = sphi 0, %s37
    %s54 = sphi 0, %s38
    %s58 = sphi 0, %s58
    %s60 = sphi 0, %s58
    %s61 = sphi 0, %s60
    %s75 = sphi 0, %s61
    %s79 = sphi 0, %s79
    %s81 = sphi 0, %s79
    %s82 = sphi 0, %s81
    %s96 = sphi 0, %s82
    %s100 = sphi 0, %s100
    %s102 = sphi 0, %s100
    %s103 = sphi 0, %s102
    %s117 = sphi 0, %s103
    %s125 = sphi 0, %s127
    %s128 = sphi 0, %s125
    %s129 = sphi 0, %s128
    %s145 = sphi 0, %s129
  $region4: #{bottleneck_forward.3} parent=0 // loop_header_branch
    %13 = sbr.rel (%p11) target = $region8
  $region5: #{bottleneck_forward.3} parent=0 // loop_body
    %s15 = ssub.s32 %s10, 1
    %s16 = ssub.s32 %s10, 2
    %s23 = sadd.s32 1, %s18
    %p24 = scmp.ge.s32.totalorder %s23, 1
    %s25 = scalar_select %p24, 0, %s23
    %s26 = sadd.s32 1, %s17
    %s27 = scalar_select %p24, %s26, %s17
    %p28 = scmp.ge.s32.totalorder %s27, 2
    %s29 = scalar_select %p28, 0, %s27
    %s30 = ssub.s32 %s17, %s29
    %s31 = ssub.s32 %s18, %s25
    %s32 = sor.u32 %s30, %s31
    %p33 = scmp.eq.s32.totalorder %s32, 0
    %s35 = sadd.s32 %s34, 1
    %s36 = scalar_select %p33, %s34, %s35
    %p39 = pneg %p33
    %p40 = scmp.eq.s32.totalorder %s10, 1
    %p41 = por %p39, %p40
    %p42 = scmp.ne.s32.totalorder %s34, %s37
    %p43 = scmp.eq.s32.totalorder %s10, 0
    %p44 = por %p42, %p43
    %p45 = scmp.ne.s32.totalorder %s34, %s37
    %p46 = scmp.eq.s32.totalorder %s15, 1
    %p47 = por %p45, %p46
    %p48 = scmp.ne.s32.totalorder %s37, %s38
    %p49 = scmp.eq.s32.totalorder %s15, 0
    %p50 = por %p48, %p49
    %p51 = scmp.ne.s32.totalorder %s37, %s38
    %p52 = scmp.eq.s32.totalorder %s16, 1
    %p53 = por %p51, %p52
    %p55 = scmp.ne.s32.totalorder %s38, %s54
    %p56 = scmp.eq.s32.totalorder %s16, 0
    %p57 = por %p55, %p56
    %s59 = sadd.s32 %s58, 1
    %p62 = scmp.eq.s32.totalorder %s10, 1
    %p63 = scmp.ne.s32.totalorder %s58, %s60
    %p64 = scmp.eq.s32.totalorder %s10, 0
    %p65 = por %p63, %p64
    %p66 = scmp.ne.s32.totalorder %s58, %s60
    %p67 = scmp.eq.s32.totalorder %s15, 1
    %p68 = por %p66, %p67
    %p69 = scmp.ne.s32.totalorder %s60, %s61
    %p70 = scmp.eq.s32.totalorder %s15, 0
    %p71 = por %p69, %p70
    %p72 = scmp.ne.s32.totalorder %s60, %s61
    %p73 = scmp.eq.s32.totalorder %s16, 1
    %p74 = por %p72, %p73
    %p76 = scmp.ne.s32.totalorder %s61, %s75
    %p77 = scmp.eq.s32.totalorder %s16, 0
    %p78 = por %p76, %p77
    %s80 = sadd.s32 %s79, 1
    %p83 = scmp.eq.s32.totalorder %s10, 1
    %p84 = scmp.ne.s32.totalorder %s79, %s81
    %p85 = scmp.eq.s32.totalorder %s10, 0
    %p86 = por %p84, %p85
    %p87 = scmp.ne.s32.totalorder %s79, %s81
    %p88 = scmp.eq.s32.totalorder %s15, 1
    %p89 = por %p87, %p88
    %p90 = scmp.ne.s32.totalorder %s81, %s82
    %p91 = scmp.eq.s32.totalorder %s15, 0
    %p92 = por %p90, %p91
    %p93 = scmp.ne.s32.totalorder %s81, %s82
    %p94 = scmp.eq.s32.totalorder %s16, 1
    %p95 = por %p93, %p94
    %p97 = scmp.ne.s32.totalorder %s82, %s96
    %p98 = scmp.eq.s32.totalorder %s16, 0
    %p99 = por %p97, %p98
    %s101 = sadd.s32 %s100, 1
    %p104 = scmp.eq.s32.totalorder %s10, 1
    %p105 = scmp.ne.s32.totalorder %s100, %s102
    %p106 = scmp.eq.s32.totalorder %s10, 0
    %p107 = por %p105, %p106
    %p108 = scmp.ne.s32.totalorder %s100, %s102
    %p109 = scmp.eq.s32.totalorder %s15, 1
    %p110 = por %p108, %p109
    %p111 = scmp.ne.s32.totalorder %s102, %s103
    %p112 = scmp.eq.s32.totalorder %s15, 0
    %p113 = por %p111, %p112
    %p114 = scmp.ne.s32.totalorder %s102, %s103
    %p115 = scmp.eq.s32.totalorder %s16, 1
    %p116 = por %p114, %p115
    %p118 = scmp.ne.s32.totalorder %s103, %s117
    %p119 = scmp.eq.s32.totalorder %s16, 0
    %p120 = por %p118, %p119
    %s121 = ssub.s32 %s17, %s29
    %s122 = ssub.s32 %s18, %s25
    %s123 = sor.u32 %s121, %s122
    %p124 = scmp.eq.s32.totalorder %s123, 0
    %s126 = sadd.s32 %s125, 1
    %s127 = scalar_select %p124, %s125, %s126
    %p130 = pneg %p124
    %p131 = scmp.eq.s32.totalorder %s10, 1
    %p132 = por %p130, %p131
    %p133 = scmp.ne.s32.totalorder %s125, %s128
    %p134 = scmp.eq.s32.totalorder %s10, 0
    %p135 = por %p133, %p134
    %p136 = scmp.ne.s32.totalorder %s125, %s128
    %p137 = scmp.eq.s32.totalorder %s15, 1
    %p138 = por %p136, %p137
    %p139 = scmp.ne.s32.totalorder %s128, %s129
    %p140 = scmp.eq.s32.totalorder %s15, 0
    %p141 = por %p139, %p140
    %p142 = scmp.ne.s32.totalorder %s128, %s129
    %p143 = scmp.eq.s32.totalorder %s16, 1
    %p144 = por %p142, %p143
    %p146 = scmp.ne.s32.totalorder %s129, %s145
    %p147 = scmp.eq.s32.totalorder %s16, 0
    %p148 = por %p146, %p147
    %p149 = scmp.le.s32.totalorder 1, %s10
    %p150 = scmp.lt.s32.totalorder %s10, 3
    %p151 = pnand %p149, %p150
    %p152 = pneg %p151
    // Predicated region
    $region9: #{bottleneck_forward.3} parent=5 // pred_check
      _
    $region10: #{bottleneck_forward.3} parent=5 // pred_check_branch
      %154 = sbr.rel (%p151) target = $region12
    $region11: #{bottleneck_forward.3} parent=5 // pred_region
      %s155 = ssub.s32 %s10, 1
      // Predicated region
      $region13: #{bottleneck_forward.3} parent=11 // pred_check
        %p156 = pneg %p71
      $region14: #{bottleneck_forward.3} parent=11 // pred_check_branch
        %158 = sbr.rel (%p156) target = $region16
      $region15: #{bottleneck_forward.3} parent=11 // pred_region
        _
      $region16: #{bottleneck_forward.3} parent=11 // pred_fallthru
        _
      // Predicated region
      $region17: #{bottleneck_forward.3} parent=11 // pred_check
        %p159 = pneg %p92
      $region18: #{bottleneck_forward.3} parent=11 // pred_check_branch
        %161 = sbr.rel (%p159) target = $region20
      $region19: #{bottleneck_forward.3} parent=11 // pred_region
        _
      $region20: #{bottleneck_forward.3} parent=11 // pred_fallthru
        _
      // Predicated region
      $region21: #{bottleneck_forward.3} parent=11 // pred_check
        %p162 = pneg %p113
      $region22: #{bottleneck_forward.3} parent=11 // pred_check_branch
        %164 = sbr.rel (%p162) target = $region24
      $region23: #{bottleneck_forward.3} parent=11 // pred_region
        _
      $region24: #{bottleneck_forward.3} parent=11 // pred_fallthru
        _
    $region12: #{bottleneck_forward.3} parent=5 // pred_fallthru
      _
    %p165 = scmp.lt.s32.totalorder %s10, 2
    // Predicated region
    $region25: #{bottleneck_forward.3} parent=5 // pred_check
      %p166 = pneg %p165
    $region26: #{bottleneck_forward.3} parent=5 // pred_check_branch
      %168 = sbr.rel (%p166) target = $region28
    $region27: #{bottleneck_forward.3} parent=5 // pred_region
      // Predicated region
      $region29: #{bottleneck_forward.3} parent=27 // pred_check
        %p169 = pneg %p44
      $region30: #{bottleneck_forward.3} parent=27 // pred_check_branch
        %171 = sbr.rel (%p169) target = $region32
      $region31: #{bottleneck_forward.3} parent=27 // pred_region
        %s172 = smul.u32 32, %s18
        %p173 = scmp.lt.s32.totalorder %s17, 1
        %s174 = scalar_select %p173, %s17, 1
        %p175 = scmp.lt.s32.totalorder %s172, 31
        %s176 = scalar_select %p175, %s172, 31
        %s177 = smul.addr %s174, 32
        %s178 = sadd.s32 %s176, %s177
        %s179 = smul.addr %s178, 4
        %s180 = scalar_lea.vmem %s0, %s179
        %s181 = smul.u32 32, %s18
      $region32: #{bottleneck_forward.3} parent=27 // pred_fallthru
        _
    $region28: #{bottleneck_forward.3} parent=5 // pred_fallthru
      _
    %p182 = scmp.le.s32.totalorder 1, %s10
    %p183 = scmp.lt.s32.totalorder %s10, 3
    %p184 = pnand %p182, %p183
    %p185 = pneg %p184
    // Predicated region
    $region33: #{bottleneck_forward.3} parent=5 // pred_check
      _
    $region34: #{bottleneck_forward.3} parent=5 // pred_check_branch
      %187 = sbr.rel (%p184) target = $region36
    $region35: #{bottleneck_forward.3} parent=5 // pred_region
      %s188 = ssub.s32 %s10, 1
      %s189 = smul.u32 32, %s20
      %p190 = scmp.lt.s32.totalorder %s19, 1
      %s191 = scalar_select %p190, %s19, 1
      %p192 = scmp.lt.s32.totalorder %s189, 31
      %s193 = scalar_select %p192, %s189, 31
      %s194 = smul.addr %s191, 32
      %s195 = sadd.s32 %s193, %s194
      %s196 = smul.addr %s195, 4
      %s197 = scalar_lea.vmem %s0, %s196
      %p198 = pneg %p50
      %p199 = pneg %p47
      %p200 = pneg %p71
      %p201 = pneg %p68
      %p202 = pneg %p92
      %p203 = pneg %p89
      %p204 = pneg %p113
      %p205 = pneg %p110
      %p206 = pneg %p141
      %p207 = pneg %p138
      %s208 = smul.u32 32, %s20
      %p209 = scmp.lt.s32.totalorder %s19, 1
      %s210 = scalar_select %p209, %s19, 1
      %p211 = scmp.lt.s32.totalorder %s208, 31
      %s212 = scalar_select %p211, %s208, 31
      %s213 = smul.addr %s210, 32
      %s214 = sadd.s32 %s212, %s213
      %s215 = smul.addr %s214, 4
      %s216 = scalar_lea.vmem %s4, %s215
      %s217 = smul.u32 32, %s20
      %p218 = scmp.lt.s32.totalorder %s19, 1
      %s219 = scalar_select %p218, %s19, 1
      %p220 = scmp.lt.s32.totalorder %s217, 31
      %s221 = scalar_select %p220, %s217, 31
      %s222 = smul.addr %s219, 32
      %s223 = sadd.s32 %s221, %s222
      %s224 = smul.addr %s223, 4
      %s225 = scalar_lea.vmem %s0, %s224
      %s226 = smul.u32 32, %s20
      %s227 = smul.u32 32, %s20
      %p228 = scmp.lt.s32.totalorder %s19, 1
      %s229 = scalar_select %p228, %s19, 1
      %p230 = scmp.lt.s32.totalorder %s227, 31
      %s231 = scalar_select %p230, %s227, 31
      %s232 = smul.addr %s229, 32
      %s233 = sadd.s32 %s231, %s232
      %s234 = smul.addr %s233, 4
      %s235 = scalar_lea.vmem %s4, %s234
      %s236 = smul.u32 32, %s20
      %v238 = vld [vmem:[%s225] sm:$0xf]
      %v239 = vld [vmem:[%s225 + $0x4] sm:$0xf]
      %v240 = vld [vmem:[%s225 + $0x8] sm:$0xf]
      %v241 = vld [vmem:[%s225 + $0xc] sm:$0xf]
      %v242 = vld [vmem:[%s225 + $0x10] sm:$0xf]
      %v243 = vld [vmem:[%s225 + $0x14] sm:$0xf]
      %v244 = vld [vmem:[%s225 + $0x18] sm:$0xf]
      %v245 = vld [vmem:[%s225 + $0x1c] sm:$0xf]
      %v246 = vld [vmem:[%s225 + $0x20] sm:$0xf]
      %v247 = vld [vmem:[%s225 + $0x24] sm:$0xf]
      %v248 = vld [vmem:[%s225 + $0x28] sm:$0xf]
      %v249 = vld [vmem:[%s225 + $0x2c] sm:$0xf]
      %v250 = vld [vmem:[%s225 + $0x30] sm:$0xf]
      %v251 = vld [vmem:[%s225 + $0x34] sm:$0xf]
      %v252 = vld [vmem:[%s225 + $0x38] sm:$0xf]
      %v253 = vld [vmem:[%s225 + $0x3c] sm:$0xf]
      %v254 = vld [vmem:[%s225 + $0x40] sm:$0xf]
      %v255 = vld [vmem:[%s225 + $0x44] sm:$0xf]
      %v256 = vld [vmem:[%s225 + $0x48] sm:$0xf]
      %v257 = vld [vmem:[%s225 + $0x4c] sm:$0xf]
      %v258 = vld [vmem:[%s225 + $0x50] sm:$0xf]
      %v259 = vld [vmem:[%s225 + $0x54] sm:$0xf]
      %v260 = vld [vmem:[%s225 + $0x58] sm:$0xf]
      %v261 = vld [vmem:[%s225 + $0x5c] sm:$0xf]
      %v262 = vld [vmem:[%s225 + $0x60] sm:$0xf]
      %v263 = vld [vmem:[%s225 + $0x64] sm:$0xf]
      %v264 = vld [vmem:[%s225 + $0x68] sm:$0xf]
      %v265 = vld [vmem:[%s225 + $0x6c] sm:$0xf]
      %v266 = vld [vmem:[%s225 + $0x70] sm:$0xf]
      %v267 = vld [vmem:[%s225 + $0x74] sm:$0xf]
      %v268 = vld [vmem:[%s225 + $0x78] sm:$0xf]
      %v269 = vld [vmem:[%s225 + $0x7c] sm:$0xf]
      %v270 = vld [vmem:[%s1] sm:$0x3]
      %v303 = vunpack.c.l.b16 %v238
      %v304 = vunpack.c.l.b16 %v239
      %v305 = vunpack.c.l.b16 %v240
      %v306 = vunpack.c.l.b16 %v241
      %v307 = vunpack.c.l.b16 %v242
      %v308 = vunpack.c.l.b16 %v243
      %v309 = vunpack.c.l.b16 %v244
      %v310 = vunpack.c.l.b16 %v245
      %v311 = vunpack.c.l.b16 %v246
      %v312 = vunpack.c.l.b16 %v247
      %v313 = vunpack.c.l.b16 %v248
      %v314 = vunpack.c.l.b16 %v249
      %v315 = vunpack.c.l.b16 %v250
      %v316 = vunpack.c.l.b16 %v251
      %v317 = vunpack.c.l.b16 %v252
      %v318 = vunpack.c.l.b16 %v253
      %v319 = vunpack.c.l.b16 %v254
      %v320 = vunpack.c.l.b16 %v255
      %v321 = vunpack.c.l.b16 %v256
      %v322 = vunpack.c.l.b16 %v257
      %v323 = vunpack.c.l.b16 %v258
      %v324 = vunpack.c.l.b16 %v259
      %v325 = vunpack.c.l.b16 %v260
      %v326 = vunpack.c.l.b16 %v261
      %v327 = vunpack.c.l.b16 %v262
      %v328 = vunpack.c.l.b16 %v263
      %v329 = vunpack.c.l.b16 %v264
      %v330 = vunpack.c.l.b16 %v265
      %v331 = vunpack.c.l.b16 %v266
      %v332 = vunpack.c.l.b16 %v267
      %v333 = vunpack.c.l.b16 %v268
      %v334 = vunpack.c.l.b16 %v269
      %v335 = vpack.c.b16 %v304, %v303
      %v336 = vpack.c.b16 %v306, %v305
      %v337 = vpack.c.b16 %v308, %v307
      %v338 = vpack.c.b16 %v310, %v309
      %v339 = vpack.c.b16 %v312, %v311
      %v340 = vpack.c.b16 %v314, %v313
      %v341 = vpack.c.b16 %v316, %v315
      %v342 = vpack.c.b16 %v318, %v317
      %v343 = vpack.c.b16 %v320, %v319
      %v344 = vpack.c.b16 %v322, %v321
      %v345 = vpack.c.b16 %v324, %v323
      %v346 = vpack.c.b16 %v326, %v325
      %v347 = vpack.c.b16 %v328, %v327
      %v348 = vpack.c.b16 %v330, %v329
      %v349 = vpack.c.b16 %v332, %v331
      %v350 = vpack.c.b16 %v334, %v333
      %vm351 = vcmask 31744
      %v353 = vsel %vm351, %v335, 0
      %v356 = vsel %vm351, %v336, 0
      %v359 = vsel %vm351, %v337, 0
      %v362 = vsel %vm351, %v338, 0
      %v365 = vsel %vm351, %v339, 0
      %v368 = vsel %vm351, %v340, 0
      %v371 = vsel %vm351, %v341, 0
      %v374 = vsel %vm351, %v342, 0
      %v377 = vsel %vm351, %v343, 0
      %v380 = vsel %vm351, %v344, 0
      %v383 = vsel %vm351, %v345, 0
      %v386 = vsel %vm351, %v346, 0
      %v389 = vsel %vm351, %v347, 0
      %v392 = vsel %vm351, %v348, 0
      %v395 = vsel %vm351, %v349, 0
      %v398 = vsel %vm351, %v350, 0
      %vm400 = vcmask 1041408
      %v402 = vsel %vm400, %v270, 0
      %404 = vmatpush.bf16.msra.mxu0 0
      %405 = vmatpush.bf16.msra.mxu0 0
      %406 = vmatpush.bf16.msra.mxu0 0
      %407 = vmatpush.bf16.msra.mxu0 0
      %408 = vmatpush.bf16.msra.mxu0 0
      %409 = vmatpush.bf16.msra.mxu0 0
      %410 = vmatpush.bf16.msra.mxu0 0
      %411 = vmatpush.bf16.msra.mxu0 %v402
      %412 = vmatmul.bf16.gmra.mxu0 %v353
      %v413 = vpop.f32.mrf.mxu0
      %v414 = vadd.f32 0.0, %v413
      %v415 = vpop.f32.mrf.mxu0
      %v416 = vadd.f32 0.0, %v415
      %417 = vmatmul.bf16.gmra.mxu0 %v356
      %v418 = vpop.f32.mrf.mxu0
      %v419 = vadd.f32 0.0, %v418
      %v420 = vpop.f32.mrf.mxu0
      %v421 = vadd.f32 0.0, %v420
      %422 = vmatmul.bf16.gmra.mxu0 %v359
      %v423 = vpop.f32.mrf.mxu0
      %v424 = vadd.f32 0.0, %v423
      %v425 = vpop.f32.mrf.mxu0
      %v426 = vadd.f32 0.0, %v425
      %427 = vmatmul.bf16.gmra.mxu0 %v362
      %v428 = vpop.f32.mrf.mxu0
      %v429 = vadd.f32 0.0, %v428
      %v430 = vpop.f32.mrf.mxu0
      %v431 = vadd.f32 0.0, %v430
      %432 = vmatmul.bf16.gmra.mxu0 %v365
      %v433 = vpop.f32.mrf.mxu0
      %v434 = vadd.f32 0.0, %v433
      %v435 = vpop.f32.mrf.mxu0
      %v436 = vadd.f32 0.0, %v435
      %437 = vmatmul.bf16.gmra.mxu0 %v368
      %v438 = vpop.f32.mrf.mxu0
      %v439 = vadd.f32 0.0, %v438
      %v440 = vpop.f32.mrf.mxu0
      %v441 = vadd.f32 0.0, %v440
      %442 = vmatmul.bf16.gmra.mxu0 %v371
      %v443 = vpop.f32.mrf.mxu0
      %v444 = vadd.f32 0.0, %v443
      %v445 = vpop.f32.mrf.mxu0
      %v446 = vadd.f32 0.0, %v445
      %447 = vmatmul.bf16.gmra.mxu0 %v374
      %v448 = vpop.f32.mrf.mxu0
      %v449 = vadd.f32 0.0, %v448
      %v450 = vpop.f32.mrf.mxu0
      %v451 = vadd.f32 0.0, %v450
      %452 = vmatmul.bf16.gmra.mxu0 %v377
      %v453 = vpop.f32.mrf.mxu0
      %v454 = vadd.f32 0.0, %v453
      %v455 = vpop.f32.mrf.mxu0
      %v456 = vadd.f32 0.0, %v455
      %457 = vmatmul.bf16.gmra.mxu0 %v380
      %v458 = vpop.f32.mrf.mxu0
      %v459 = vadd.f32 0.0, %v458
      %v460 = vpop.f32.mrf.mxu0
      %v461 = vadd.f32 0.0, %v460
      %462 = vmatmul.bf16.gmra.mxu0 %v383
      %v463 = vpop.f32.mrf.mxu0
      %v464 = vadd.f32 0.0, %v463
      %v465 = vpop.f32.mrf.mxu0
      %v466 = vadd.f32 0.0, %v465
      %467 = vmatmul.bf16.gmra.mxu0 %v386
      %v468 = vpop.f32.mrf.mxu0
      %v469 = vadd.f32 0.0, %v468
      %v470 = vpop.f32.mrf.mxu0
      %v471 = vadd.f32 0.0, %v470
      %472 = vmatmul.bf16.gmra.mxu0 %v389
      %v473 = vpop.f32.mrf.mxu0
      %v474 = vadd.f32 0.0, %v473
      %v475 = vpop.f32.mrf.mxu0
      %v476 = vadd.f32 0.0, %v475
      %477 = vmatmul.bf16.gmra.mxu0 %v392
      %v478 = vpop.f32.mrf.mxu0
      %v479 = vadd.f32 0.0, %v478
      %v480 = vpop.f32.mrf.mxu0
      %v481 = vadd.f32 0.0, %v480
      %482 = vmatmul.bf16.gmra.mxu0 %v395
      %v483 = vpop.f32.mrf.mxu0
      %v484 = vadd.f32 0.0, %v483
      %v485 = vpop.f32.mrf.mxu0
      %v486 = vadd.f32 0.0, %v485
      %487 = vmatmul.bf16.gmra.mxu0 %v398
      %v488 = vpop.f32.mrf.mxu0
      %v489 = vadd.f32 0.0, %v488
      %v490 = vpop.f32.mrf.mxu0
      %v491 = vadd.f32 0.0, %v490
      %492 = vdwg.mxu0
      %v493 = vld [vmem:[%s2] sm:$0x1]
      %v495 = vperm.slane %v493, 0
      %v497 = vmul.f32 %v414, %v495
      %v498 = vmul.f32 %v416, %v495
      %v499 = vmul.f32 %v419, %v495
      %v500 = vmul.f32 %v421, %v495
      %v501 = vmul.f32 %v424, %v495
      %v502 = vmul.f32 %v426, %v495
      %v503 = vmul.f32 %v429, %v495
      %v504 = vmul.f32 %v431, %v495
      %v505 = vmul.f32 %v434, %v495
      %v506 = vmul.f32 %v436, %v495
      %v507 = vmul.f32 %v439, %v495
      %v508 = vmul.f32 %v441, %v495
      %v509 = vmul.f32 %v444, %v495
      %v510 = vmul.f32 %v446, %v495
      %v511 = vmul.f32 %v449, %v495
      %v512 = vmul.f32 %v451, %v495
      %v513 = vmul.f32 %v454, %v495
      %v514 = vmul.f32 %v456, %v495
      %v515 = vmul.f32 %v459, %v495
      %v516 = vmul.f32 %v461, %v495
      %v517 = vmul.f32 %v464, %v495
      %v518 = vmul.f32 %v466, %v495
      %v519 = vmul.f32 %v469, %v495
      %v520 = vmul.f32 %v471, %v495
      %v521 = vmul.f32 %v474, %v495
      %v522 = vmul.f32 %v476, %v495
      %v523 = vmul.f32 %v479, %v495
      %v524 = vmul.f32 %v481, %v495
      %v525 = vmul.f32 %v484, %v495
      %v526 = vmul.f32 %v486, %v495
      %v527 = vmul.f32 %v489, %v495
      %v528 = vmul.f32 %v491, %v495
      %v529 = vld [vmem:[%s3] sm:$0x1]
      %v531 = vperm.slane %v529, 0
      %v533 = vadd.f32 %v497, %v531
      %v534 = vadd.f32 %v498, %v531
      %v535 = vadd.f32 %v499, %v531
      %v536 = vadd.f32 %v500, %v531
      %v537 = vadd.f32 %v501, %v531
      %v538 = vadd.f32 %v502, %v531
      %v539 = vadd.f32 %v503, %v531
      %v540 = vadd.f32 %v504, %v531
      %v541 = vadd.f32 %v505, %v531
      %v542 = vadd.f32 %v506, %v531
      %v543 = vadd.f32 %v507, %v531
      %v544 = vadd.f32 %v508, %v531
      %v545 = vadd.f32 %v509, %v531
      %v546 = vadd.f32 %v510, %v531
      %v547 = vadd.f32 %v511, %v531
      %v548 = vadd.f32 %v512, %v531
      %v549 = vadd.f32 %v513, %v531
      %v550 = vadd.f32 %v514, %v531
      %v551 = vadd.f32 %v515, %v531
      %v552 = vadd.f32 %v516, %v531
      %v553 = vadd.f32 %v517, %v531
      %v554 = vadd.f32 %v518, %v531
      %v555 = vadd.f32 %v519, %v531
      %v556 = vadd.f32 %v520, %v531
      %v557 = vadd.f32 %v521, %v531
      %v558 = vadd.f32 %v522, %v531
      %v559 = vadd.f32 %v523, %v531
      %v560 = vadd.f32 %v524, %v531
      %v561 = vadd.f32 %v525, %v531
      %v562 = vadd.f32 %v526, %v531
      %v563 = vadd.f32 %v527, %v531
      %v564 = vadd.f32 %v528, %v531
      %v565 = vmax.f32 %v533, 0.0
      %v566 = vmax.f32 %v534, 0.0
      %v567 = vmax.f32 %v535, 0.0
      %v568 = vmax.f32 %v536, 0.0
      %v569 = vmax.f32 %v537, 0.0
      %v570 = vmax.f32 %v538, 0.0
      %v571 = vmax.f32 %v539, 0.0
      %v572 = vmax.f32 %v540, 0.0
      %v573 = vmax.f32 %v541, 0.0
      %v574 = vmax.f32 %v542, 0.0
      %v575 = vmax.f32 %v543, 0.0
      %v576 = vmax.f32 %v544, 0.0
      %v577 = vmax.f32 %v545, 0.0
      %v578 = vmax.f32 %v546, 0.0
      %v579 = vmax.f32 %v547, 0.0
      %v580 = vmax.f32 %v548, 0.0
      %v581 = vmax.f32 %v549, 0.0
      %v582 = vmax.f32 %v550, 0.0
      %v583 = vmax.f32 %v551, 0.0
      %v584 = vmax.f32 %v552, 0.0
      %v585 = vmax.f32 %v553, 0.0
      %v586 = vmax.f32 %v554, 0.0
      %v587 = vmax.f32 %v555, 0.0
      %v588 = vmax.f32 %v556, 0.0
      %v589 = vmax.f32 %v557, 0.0
      %v590 = vmax.f32 %v558, 0.0
      %v591 = vmax.f32 %v559, 0.0
      %v592 = vmax.f32 %v560, 0.0
      %v593 = vmax.f32 %v561, 0.0
      %v594 = vmax.f32 %v562, 0.0
      %v595 = vmax.f32 %v563, 0.0
      %v596 = vmax.f32 %v564, 0.0
      %v597 = vpack.c.bf16 %v565, %v565
      %v598 = vpack.c.bf16 %v566, %v566
      %v599 = vpack.c.bf16 %v567, %v567
      %v600 = vpack.c.bf16 %v568, %v568
      %v601 = vpack.c.bf16 %v569, %v569
      %v602 = vpack.c.bf16 %v570, %v570
      %v603 = vpack.c.bf16 %v571, %v571
      %v604 = vpack.c.bf16 %v572, %v572
      %v605 = vpack.c.bf16 %v573, %v573
      %v606 = vpack.c.bf16 %v574, %v574
      %v607 = vpack.c.bf16 %v575, %v575
      %v608 = vpack.c.bf16 %v576, %v576
      %v609 = vpack.c.bf16 %v577, %v577
      %v610 = vpack.c.bf16 %v578, %v578
      %v611 = vpack.c.bf16 %v579, %v579
      %v612 = vpack.c.bf16 %v580, %v580
      %v613 = vpack.c.bf16 %v581, %v581
      %v614 = vpack.c.bf16 %v582, %v582
      %v615 = vpack.c.bf16 %v583, %v583
      %v616 = vpack.c.bf16 %v584, %v584
      %v617 = vpack.c.bf16 %v585, %v585
      %v618 = vpack.c.bf16 %v586, %v586
      %v619 = vpack.c.bf16 %v587, %v587
      %v620 = vpack.c.bf16 %v588, %v588
      %v621 = vpack.c.bf16 %v589, %v589
      %v622 = vpack.c.bf16 %v590, %v590
      %v623 = vpack.c.bf16 %v591, %v591
      %v624 = vpack.c.bf16 %v592, %v592
      %v625 = vpack.c.bf16 %v593, %v593
      %v626 = vpack.c.bf16 %v594, %v594
      %v627 = vpack.c.bf16 %v595, %v595
      %v628 = vpack.c.bf16 %v596, %v596
      %vm629 = vcmask 27648
      %630 = vst.msk [vmem:[%s235] sm:$0xf] %vm629, %v597
      %631 = vst.msk [vmem:[%s235 + $0x4] sm:$0xf] %vm629, %v598
      %632 = vst.msk [vmem:[%s235 + $0x8] sm:$0xf] %vm629, %v599
      %633 = vst.msk [vmem:[%s235 + $0xc] sm:$0xf] %vm629, %v600
      %634 = vst.msk [vmem:[%s235 + $0x10] sm:$0xf] %vm629, %v601
      %635 = vst.msk [vmem:[%s235 + $0x14] sm:$0xf] %vm629, %v602
      %636 = vst.msk [vmem:[%s235 + $0x18] sm:$0xf] %vm629, %v603
      %637 = vst.msk [vmem:[%s235 + $0x1c] sm:$0xf] %vm629, %v604
      %638 = vst.msk [vmem:[%s235 + $0x20] sm:$0xf] %vm629, %v605
      %639 = vst.msk [vmem:[%s235 + $0x24] sm:$0xf] %vm629, %v606
      %640 = vst.msk [vmem:[%s235 + $0x28] sm:$0xf] %vm629, %v607
      %641 = vst.msk [vmem:[%s235 + $0x2c] sm:$0xf] %vm629, %v608
      %642 = vst.msk [vmem:[%s235 + $0x30] sm:$0xf] %vm629, %v609
      %643 = vst.msk [vmem:[%s235 + $0x34] sm:$0xf] %vm629, %v610
      %644 = vst.msk [vmem:[%s235 + $0x38] sm:$0xf] %vm629, %v611
      %645 = vst.msk [vmem:[%s235 + $0x3c] sm:$0xf] %vm629, %v612
      %646 = vst.msk [vmem:[%s235 + $0x40] sm:$0xf] %vm629, %v613
      %647 = vst.msk [vmem:[%s235 + $0x44] sm:$0xf] %vm629, %v614
      %648 = vst.msk [vmem:[%s235 + $0x48] sm:$0xf] %vm629, %v615
      %649 = vst.msk [vmem:[%s235 + $0x4c] sm:$0xf] %vm629, %v616
      %650 = vst.msk [vmem:[%s235 + $0x50] sm:$0xf] %vm629, %v617
      %651 = vst.msk [vmem:[%s235 + $0x54] sm:$0xf] %vm629, %v618
      %652 = vst.msk [vmem:[%s235 + $0x58] sm:$0xf] %vm629, %v619
      %653 = vst.msk [vmem:[%s235 + $0x5c] sm:$0xf] %vm629, %v620
      %654 = vst.msk [vmem:[%s235 + $0x60] sm:$0xf] %vm629, %v621
      %655 = vst.msk [vmem:[%s235 + $0x64] sm:$0xf] %vm629, %v622
      %656 = vst.msk [vmem:[%s235 + $0x68] sm:$0xf] %vm629, %v623
      %657 = vst.msk [vmem:[%s235 + $0x6c] sm:$0xf] %vm629, %v624
      %658 = vst.msk [vmem:[%s235 + $0x70] sm:$0xf] %vm629, %v625
      %659 = vst.msk [vmem:[%s235 + $0x74] sm:$0xf] %vm629, %v626
      %660 = vst.msk [vmem:[%s235 + $0x78] sm:$0xf] %vm629, %v627
      %661 = vst.msk [vmem:[%s235 + $0x7c] sm:$0xf] %vm629, %v628
      %s662 = smul.u32 32, %s20
      %p663 = scmp.lt.s32.totalorder %s19, 1
      %s664 = scalar_select %p663, %s19, 1
      %p665 = scmp.lt.s32.totalorder %s662, 31
      %s666 = scalar_select %p665, %s662, 31
      %s667 = smul.addr %s664, 32
      %s668 = sadd.s32 %s666, %s667
      %s669 = smul.addr %s668, 4
      %s670 = scalar_lea.vmem %s4, %s669
      // Predicated region
      $region37: #{bottleneck_forward.3} parent=35 // pred_check
        %p671 = pneg %p138
      $region38: #{bottleneck_forward.3} parent=35 // pred_check_branch
        %673 = sbr.rel (%p671) target = $region40
      $region39: #{bottleneck_forward.3} parent=35 // pred_region
        %s674 = smul.u32 32, %s20
      $region40: #{bottleneck_forward.3} parent=35 // pred_fallthru
        _
    $region36: #{bottleneck_forward.3} parent=5 // pred_fallthru
      _
    %p675 = scmp.le.s32.totalorder 2, %s10
    // Predicated region
    $region41: #{bottleneck_forward.3} parent=5 // pred_check
      %p676 = pneg %p675
    $region42: #{bottleneck_forward.3} parent=5 // pred_check_branch
      %678 = sbr.rel (%p676) target = $region44
    $region43: #{bottleneck_forward.3} parent=5 // pred_region
      %s679 = ssub.s32 %s10, 2
      // Predicated region
      $region45: #{bottleneck_forward.3} parent=43 // pred_check
        %p680 = pneg %p144
      $region46: #{bottleneck_forward.3} parent=43 // pred_check_branch
        %682 = sbr.rel (%p680) target = $region48
      $region47: #{bottleneck_forward.3} parent=43 // pred_region
        %s683 = smul.u32 32, %s22
        %p684 = scmp.lt.s32.totalorder %s21, 1
        %s685 = scalar_select %p684, %s21, 1
        %p686 = scmp.lt.s32.totalorder %s683, 31
        %s687 = scalar_select %p686, %s683, 31
        %s688 = smul.addr %s685, 32
        %s689 = sadd.s32 %s687, %s688
        %s690 = smul.addr %s689, 4
        %s691 = scalar_lea.vmem %s4, %s690
      $region48: #{bottleneck_forward.3} parent=43 // pred_fallthru
        _
    $region44: #{bottleneck_forward.3} parent=5 // pred_fallthru
      _
  $region6: #{bottleneck_forward.3} parent=0 // loop_footer
    %s14 = sadd.s32 1, %s10
  $region7: #{bottleneck_forward.3} parent=0 // loop_footer_branch
    %9 = sbr.rel target = $region3
  $region8: #{bottleneck_forward.3} parent=0 // loop_exit
    _

// kernel: bottleneck_forward.5
$region0: #{bottleneck_forward.5}
  #allocation0 [shape = 'u32[]', space=smem, size = 0x4, offset = 0x4, fixed_abs, tag = 'smem constant byte address 0x4 - core index']
  #allocation1 [shape = 'u32[72,128]{1,0:T(1,128)}', space=vmem, size = 0x9000, scoped, tag = 'internal scratch']
  %s0 = inlined_call_operand.vmem [shape: bf16[2,64,4], index: 0, kind: input, shape index: {}]
  %s1 = inlined_call_operand.vmem [shape: bf16[4,16], index: 1, kind: input, shape index: {}]
  %s2 = inlined_call_operand.vmem [shape: f32[1,16], index: 2, kind: input, shape index: {}]
  %s3 = inlined_call_operand.vmem [shape: f32[1,16], index: 3, kind: input, shape index: {}]
  %s4 = inlined_call_operand.vmem [shape: bf16[2,64,4], index: 4, kind: input, shape index: {}]
  %s5 = inlined_call_operand.vmem [shape: bf16[4,16], index: 5, kind: input, shape index: {}]
  %s6 = inlined_call_operand.vmem [shape: f32[1,16], index: 6, kind: input, shape index: {}]
  %s7 = inlined_call_operand.vmem [shape: f32[1,16], index: 7, kind: input, shape index: {}]
  %s8 = inlined_call_operand.hbm [shape: f32[2,64,16], index: 8, kind: output, shape index: {}]
  %s9 = sld [smem:[#allocation0]]
  $region65: #{bottleneck_forward.5} parent=0
    _
  %s11 = ssub.s32 1, %s9
  %s12 = scalar_select 0, %s11, %s9
  $region1: #{bottleneck_forward.5} parent=0
    #allocation2 [shape = 'u8[65536]{0}', space=vmem, size = 0x10000, scoped, tag = 'output window, operand 0']
    #allocation3 [shape = 's32[2]{0}', space=sflag, size = 0x8, scoped, tag = 'scoped memory for bottleneck_forward.5']
    %13 = vsyncpa [#allocation3], 0
    %s14 = scalar_lea.sflag [#allocation3], 1
    %15 = vsyncpa %s14, 0
    loop: start=0, step=1, limit=4
    $region2: #{bottleneck_forward.5} parent=1 // loop_pre_header
      _
    $region3: #{bottleneck_forward.5} parent=1 // loop_header
      %s17 = sphi 0, %s21
      %p18 = scmp.ge.s32.totalorder %s17, 4
      %s24 = sphi 0, %s36
      %s25 = sphi 0, %s32
      %s26 = sphi 0, %s24
      %s27 = sphi 0, %s25
      %s28 = sphi 0, %s26
      %s29 = sphi 0, %s27
      %s41 = sphi 0, %s43
      %s44 = sphi 0, %s41
      %s45 = sphi 0, %s44
      %s61 = sphi 0, %s45
      %s65 = sphi 0, %s65
      %s67 = sphi 0, %s65
      %s68 = sphi 0, %s67
      %s82 = sphi 0, %s68
      %s86 = sphi 0, %s86
      %s88 = sphi 0, %s86
      %s89 = sphi 0, %s88
      %s103 = sphi 0, %s89
      %s107 = sphi 0, %s107
      %s109 = sphi 0, %s107
      %s110 = sphi 0, %s109
      %s124 = sphi 0, %s110
      %s132 = sphi 0, %s134
      %s135 = sphi 0, %s132
      %s136 = sphi 0, %s135
      %s152 = sphi 0, %s136
      %s156 = sphi 0, %s156
      %s158 = sphi 0, %s156
      %s159 = sphi 0, %s158
      %s173 = sphi 0, %s159
      %s177 = sphi 0, %s177
      %s179 = sphi 0, %s177
      %s180 = sphi 0, %s179
      %s194 = sphi 0, %s180
      %s198 = sphi 0, %s198
      %s200 = sphi 0, %s198
      %s201 = sphi 0, %s200
      %s215 = sphi 0, %s201
      %s223 = sphi 0, %s225
      %s226 = sphi 0, %s223
      %s227 = sphi 0, %s226
      %s243 = sphi 0, %s227
    $region4: #{bottleneck_forward.5} parent=1 // loop_header_branch
      %20 = sbr.rel (%p18) target = $region8
    $region5: #{bottleneck_forward.5} parent=1 // loop_body
      %s22 = ssub.s32 %s17, 1
      %s23 = ssub.s32 %s17, 2
      %s30 = sadd.s32 1, %s25
      %p31 = scmp.ge.s32.totalorder %s30, 1
      %s32 = scalar_select %p31, 0, %s30
      %s33 = sadd.s32 1, %s24
      %s34 = scalar_select %p31, %s33, %s24
      %p35 = scmp.ge.s32.totalorder %s34, 2
      %s36 = scalar_select %p35, 0, %s34
      %s37 = ssub.s32 %s24, %s36
      %s38 = ssub.s32 %s25, %s32
      %s39 = sor.u32 %s37, %s38
      %p40 = scmp.eq.s32.totalorder %s39, 0
      %s42 = sadd.s32 %s41, 1
      %s43 = scalar_select %p40, %s41, %s42
      %p46 = pneg %p40
      %p47 = scmp.eq.s32.totalorder %s17, 1
      %p48 = por %p46, %p47
      %p49 = scmp.ne.s32.totalorder %s41, %s44
      %p50 = scmp.eq.s32.totalorder %s17, 0
      %p51 = por %p49, %p50
      %p52 = scmp.ne.s32.totalorder %s41, %s44
      %p53 = scmp.eq.s32.totalorder %s22, 1
      %p54 = por %p52, %p53
      %p55 = scmp.ne.s32.totalorder %s44, %s45
      %p56 = scmp.eq.s32.totalorder %s22, 0
      %p57 = por %p55, %p56
      %p58 = scmp.ne.s32.totalorder %s44, %s45
      %p59 = scmp.eq.s32.totalorder %s23, 1
      %p60 = por %p58, %p59
      %p62 = scmp.ne.s32.totalorder %s45, %s61
      %p63 = scmp.eq.s32.totalorder %s23, 0
      %p64 = por %p62, %p63
      %s66 = sadd.s32 %s65, 1
      %p69 = scmp.eq.s32.totalorder %s17, 1
      %p70 = scmp.ne.s32.totalorder %s65, %s67
      %p71 = scmp.eq.s32.totalorder %s17, 0
      %p72 = por %p70, %p71
      %p73 = scmp.ne.s32.totalorder %s65, %s67
      %p74 = scmp.eq.s32.totalorder %s22, 1
      %p75 = por %p73, %p74
      %p76 = scmp.ne.s32.totalorder %s67, %s68
      %p77 = scmp.eq.s32.totalorder %s22, 0
      %p78 = por %p76, %p77
      %p79 = scmp.ne.s32.totalorder %s67, %s68
      %p80 = scmp.eq.s32.totalorder %s23, 1
      %p81 = por %p79, %p80
      %p83 = scmp.ne.s32.totalorder %s68, %s82
      %p84 = scmp.eq.s32.totalorder %s23, 0
      %p85 = por %p83, %p84
      %s87 = sadd.s32 %s86, 1
      %p90 = scmp.eq.s32.totalorder %s17, 1
      %p91 = scmp.ne.s32.totalorder %s86, %s88
      %p92 = scmp.eq.s32.totalorder %s17, 0
      %p93 = por %p91, %p92
      %p94 = scmp.ne.s32.totalorder %s86, %s88
      %p95 = scmp.eq.s32.totalorder %s22, 1
      %p96 = por %p94, %p95
      %p97 = scmp.ne.s32.totalorder %s88, %s89
      %p98 = scmp.eq.s32.totalorder %s22, 0
      %p99 = por %p97, %p98
      %p100 = scmp.ne.s32.totalorder %s88, %s89
      %p101 = scmp.eq.s32.totalorder %s23, 1
      %p102 = por %p100, %p101
      %p104 = scmp.ne.s32.totalorder %s89, %s103
      %p105 = scmp.eq.s32.totalorder %s23, 0
      %p106 = por %p104, %p105
      %s108 = sadd.s32 %s107, 1
      %p111 = scmp.eq.s32.totalorder %s17, 1
      %p112 = scmp.ne.s32.totalorder %s107, %s109
      %p113 = scmp.eq.s32.totalorder %s17, 0
      %p114 = por %p112, %p113
      %p115 = scmp.ne.s32.totalorder %s107, %s109
      %p116 = scmp.eq.s32.totalorder %s22, 1
      %p117 = por %p115, %p116
      %p118 = scmp.ne.s32.totalorder %s109, %s110
      %p119 = scmp.eq.s32.totalorder %s22, 0
      %p120 = por %p118, %p119
      %p121 = scmp.ne.s32.totalorder %s109, %s110
      %p122 = scmp.eq.s32.totalorder %s23, 1
      %p123 = por %p121, %p122
      %p125 = scmp.ne.s32.totalorder %s110, %s124
      %p126 = scmp.eq.s32.totalorder %s23, 0
      %p127 = por %p125, %p126
      %s128 = ssub.s32 %s24, %s36
      %s129 = ssub.s32 %s25, %s32
      %s130 = sor.u32 %s128, %s129
      %p131 = scmp.eq.s32.totalorder %s130, 0
      %s133 = sadd.s32 %s132, 1
      %s134 = scalar_select %p131, %s132, %s133
      %p137 = pneg %p131
      %p138 = scmp.eq.s32.totalorder %s17, 1
      %p139 = por %p137, %p138
      %p140 = scmp.ne.s32.totalorder %s132, %s135
      %p141 = scmp.eq.s32.totalorder %s17, 0
      %p142 = por %p140, %p141
      %p143 = scmp.ne.s32.totalorder %s132, %s135
      %p144 = scmp.eq.s32.totalorder %s22, 1
      %p145 = por %p143, %p144
      %p146 = scmp.ne.s32.totalorder %s135, %s136
      %p147 = scmp.eq.s32.totalorder %s22, 0
      %p148 = por %p146, %p147
      %p149 = scmp.ne.s32.totalorder %s135, %s136
      %p150 = scmp.eq.s32.totalorder %s23, 1
      %p151 = por %p149, %p150
      %p153 = scmp.ne.s32.totalorder %s136, %s152
      %p154 = scmp.eq.s32.totalorder %s23, 0
      %p155 = por %p153, %p154
      %s157 = sadd.s32 %s156, 1
      %p160 = scmp.eq.s32.totalorder %s17, 1
      %p161 = scmp.ne.s32.totalorder %s156, %s158
      %p162 = scmp.eq.s32.totalorder %s17, 0
      %p163 = por %p161, %p162
      %p164 = scmp.ne.s32.totalorder %s156, %s158
      %p165 = scmp.eq.s32.totalorder %s22, 1
      %p166 = por %p164, %p165
      %p167 = scmp.ne.s32.totalorder %s158, %s159
      %p168 = scmp.eq.s32.totalorder %s22, 0
      %p169 = por %p167, %p168
      %p170 = scmp.ne.s32.totalorder %s158, %s159
      %p171 = scmp.eq.s32.totalorder %s23, 1
      %p172 = por %p170, %p171
      %p174 = scmp.ne.s32.totalorder %s159, %s173
      %p175 = scmp.eq.s32.totalorder %s23, 0
      %p176 = por %p174, %p175
      %s178 = sadd.s32 %s177, 1
      %p181 = scmp.eq.s32.totalorder %s17, 1
      %p182 = scmp.ne.s32.totalorder %s177, %s179
      %p183 = scmp.eq.s32.totalorder %s17, 0
      %p184 = por %p182, %p183
      %p185 = scmp.ne.s32.totalorder %s177, %s179
      %p186 = scmp.eq.s32.totalorder %s22, 1
      %p187 = por %p185, %p186
      %p188 = scmp.ne.s32.totalorder %s179, %s180
      %p189 = scmp.eq.s32.totalorder %s22, 0
      %p190 = por %p188, %p189
      %p191 = scmp.ne.s32.totalorder %s179, %s180
      %p192 = scmp.eq.s32.totalorder %s23, 1
      %p193 = por %p191, %p192
      %p195 = scmp.ne.s32.totalorder %s180, %s194
      %p196 = scmp.eq.s32.totalorder %s23, 0
      %p197 = por %p195, %p196
      %s199 = sadd.s32 %s198, 1
      %p202 = scmp.eq.s32.totalorder %s17, 1
      %p203 = scmp.ne.s32.totalorder %s198, %s200
      %p204 = scmp.eq.s32.totalorder %s17, 0
      %p205 = por %p203, %p204
      %p206 = scmp.ne.s32.totalorder %s198, %s200
      %p207 = scmp.eq.s32.totalorder %s22, 1
      %p208 = por %p206, %p207
      %p209 = scmp.ne.s32.totalorder %s200, %s201
      %p210 = scmp.eq.s32.totalorder %s22, 0
      %p211 = por %p209, %p210
      %p212 = scmp.ne.s32.totalorder %s200, %s201
      %p213 = scmp.eq.s32.totalorder %s23, 1
      %p214 = por %p212, %p213
      %p216 = scmp.ne.s32.totalorder %s201, %s215
      %p217 = scmp.eq.s32.totalorder %s23, 0
      %p218 = por %p216, %p217
      %s219 = ssub.s32 %s24, %s36
      %s220 = ssub.s32 %s25, %s32
      %s221 = sor.u32 %s219, %s220
      %p222 = scmp.eq.s32.totalorder %s221, 0
      %s224 = sadd.s32 %s223, 1
      %s225 = scalar_select %p222, %s223, %s224
      %p228 = pneg %p222
      %p229 = scmp.eq.s32.totalorder %s17, 1
      %p230 = por %p228, %p229
      %p231 = scmp.ne.s32.totalorder %s223, %s226
      %p232 = scmp.eq.s32.totalorder %s17, 0
      %p233 = por %p231, %p232
      %p234 = scmp.ne.s32.totalorder %s223, %s226
      %p235 = scmp.eq.s32.totalorder %s22, 1
      %p236 = por %p234, %p235
      %p237 = scmp.ne.s32.totalorder %s226, %s227
      %p238 = scmp.eq.s32.totalorder %s22, 0
      %p239 = por %p237, %p238
      %p240 = scmp.ne.s32.totalorder %s226, %s227
      %p241 = scmp.eq.s32.totalorder %s23, 1
      %p242 = por %p240, %p241
      %p244 = scmp.ne.s32.totalorder %s227, %s243
      %p245 = scmp.eq.s32.totalorder %s23, 0
      %p246 = por %p244, %p245
      %p247 = scmp.le.s32.totalorder 1, %s17
      %p248 = scmp.lt.s32.totalorder %s17, 3
      %p249 = pnand %p247, %p248
      %p250 = pneg %p249
      // Predicated region
      $region9: #{bottleneck_forward.5} parent=5 // pred_check
        _
      $region10: #{bottleneck_forward.5} parent=5 // pred_check_branch
        %252 = sbr.rel (%p249) target = $region12
      $region11: #{bottleneck_forward.5} parent=5 // pred_region
        %s253 = ssub.s32 %s17, 1
        // Predicated region
        $region13: #{bottleneck_forward.5} parent=11 // pred_check
          %p254 = pneg %p78
        $region14: #{bottleneck_forward.5} parent=11 // pred_check_branch
          %256 = sbr.rel (%p254) target = $region16
        $region15: #{bottleneck_forward.5} parent=11 // pred_region
          _
        $region16: #{bottleneck_forward.5} parent=11 // pred_fallthru
          _
        // Predicated region
        $region17: #{bottleneck_forward.5} parent=11 // pred_check
          %p257 = pneg %p99
        $region18: #{bottleneck_forward.5} parent=11 // pred_check_branch
          %259 = sbr.rel (%p257) target = $region20
        $region19: #{bottleneck_forward.5} parent=11 // pred_region
          _
        $region20: #{bottleneck_forward.5} parent=11 // pred_fallthru
          _
        // Predicated region
        $region21: #{bottleneck_forward.5} parent=11 // pred_check
          %p260 = pneg %p120
        $region22: #{bottleneck_forward.5} parent=11 // pred_check_branch
          %262 = sbr.rel (%p260) target = $region24
        $region23: #{bottleneck_forward.5} parent=11 // pred_region
          _
        $region24: #{bottleneck_forward.5} parent=11 // pred_fallthru
          _
        // Predicated region
        $region25: #{bottleneck_forward.5} parent=11 // pred_check
          %p263 = pneg %p169
        $region26: #{bottleneck_forward.5} parent=11 // pred_check_branch
          %265 = sbr.rel (%p263) target = $region28
        $region27: #{bottleneck_forward.5} parent=11 // pred_region
          _
        $region28: #{bottleneck_forward.5} parent=11 // pred_fallthru
          _
        // Predicated region
        $region29: #{bottleneck_forward.5} parent=11 // pred_check
          %p266 = pneg %p190
        $region30: #{bottleneck_forward.5} parent=11 // pred_check_branch
          %268 = sbr.rel (%p266) target = $region32
        $region31: #{bottleneck_forward.5} parent=11 // pred_region
          _
        $region32: #{bottleneck_forward.5} parent=11 // pred_fallthru
          _
        // Predicated region
        $region33: #{bottleneck_forward.5} parent=11 // pred_check
          %p269 = pneg %p211
        $region34: #{bottleneck_forward.5} parent=11 // pred_check_branch
          %271 = sbr.rel (%p269) target = $region36
        $region35: #{bottleneck_forward.5} parent=11 // pred_region
          _
        $region36: #{bottleneck_forward.5} parent=11 // pred_fallthru
          _
      $region12: #{bottleneck_forward.5} parent=5 // pred_fallthru
        _
      %p272 = scmp.lt.s32.totalorder %s17, 2
      // Predicated region
      $region37: #{bottleneck_forward.5} parent=5 // pred_check
        %p273 = pneg %p272
      $region38: #{bottleneck_forward.5} parent=5 // pred_check_branch
        %275 = sbr.rel (%p273) target = $region40
      $region39: #{bottleneck_forward.5} parent=5 // pred_region
        // Predicated region
        $region41: #{bottleneck_forward.5} parent=39 // pred_check
          %p276 = pneg %p51
        $region42: #{bottleneck_forward.5} parent=39 // pred_check_branch
          %278 = sbr.rel (%p276) target = $region44
        $region43: #{bottleneck_forward.5} parent=39 // pred_region
          %s279 = smul.u32 8, %s25
          %p280 = scmp.lt.s32.totalorder %s24, 1
          %s281 = scalar_select %p280, %s24, 1
          %p282 = scmp.lt.s32.totalorder %s279, 7
          %s283 = scalar_select %p282, %s279, 7
          %s284 = smul.addr %s281, 8
          %s285 = sadd.s32 %s283, %s284
          %s286 = smul.addr %s285, 4
          %s287 = scalar_lea.vmem %s0, %s286
          %s288 = smul.u32 8, %s25
        $region44: #{bottleneck_forward.5} parent=39 // pred_fallthru
          _
        // Predicated region
        $region45: #{bottleneck_forward.5} parent=39 // pred_check
          %p289 = pneg %p142
        $region46: #{bottleneck_forward.5} parent=39 // pred_check_branch
          %291 = sbr.rel (%p289) target = $region48
        $region47: #{bottleneck_forward.5} parent=39 // pred_region
          %s292 = smul.u32 8, %s25
          %p293 = scmp.lt.s32.totalorder %s24, 1
          %s294 = scalar_select %p293, %s24, 1
          %p295 = scmp.lt.s32.totalorder %s292, 7
          %s296 = scalar_select %p295, %s292, 7
          %s297 = smul.addr %s294, 8
          %s298 = sadd.s32 %s296, %s297
          %s299 = smul.addr %s298, 4
          %s300 = scalar_lea.vmem %s4, %s299
          %s301 = smul.u32 8, %s25
        $region48: #{bottleneck_forward.5} parent=39 // pred_fallthru
          _
      $region40: #{bottleneck_forward.5} parent=5 // pred_fallthru
        _
      %p302 = scmp.le.s32.totalorder 1, %s17
      %p303 = scmp.lt.s32.totalorder %s17, 3
      %p304 = pnand %p302, %p303
      %p305 = pneg %p304
      // Predicated region
      $region49: #{bottleneck_forward.5} parent=5 // pred_check
        _
      $region50: #{bottleneck_forward.5} parent=5 // pred_check_branch
        %307 = sbr.rel (%p304) target = $region52
      $region51: #{bottleneck_forward.5} parent=5 // pred_region
        %s308 = ssub.s32 %s17, 1
        %s309 = smul.u32 8, %s27
        %p310 = scmp.lt.s32.totalorder %s26, 1
        %s311 = scalar_select %p310, %s26, 1
        %p312 = scmp.lt.s32.totalorder %s309, 7
        %s313 = scalar_select %p312, %s309, 7
        %s314 = smul.addr %s311, 8
        %s315 = sadd.s32 %s313, %s314
        %s316 = smul.addr %s315, 4
        %s317 = scalar_lea.vmem %s0, %s316
        %p318 = pneg %p57
        %p319 = pneg %p54
        %p320 = pneg %p78
        %p321 = pneg %p75
        %p322 = pneg %p99
        %p323 = pneg %p96
        %p324 = pneg %p120
        %p325 = pneg %p117
        %s326 = smul.u32 8, %s27
        %p327 = scmp.lt.s32.totalorder %s26, 1
        %s328 = scalar_select %p327, %s26, 1
        %p329 = scmp.lt.s32.totalorder %s326, 7
        %s330 = scalar_select %p329, %s326, 7
        %s331 = smul.addr %s328, 8
        %s332 = sadd.s32 %s330, %s331
        %s333 = smul.addr %s332, 4
        %s334 = scalar_lea.vmem %s4, %s333
        %p335 = pneg %p148
        %p336 = pneg %p145
        %p337 = pneg %p169
        %p338 = pneg %p166
        %p339 = pneg %p190
        %p340 = pneg %p187
        %p341 = pneg %p211
        %p342 = pneg %p208
        %p343 = pneg %p239
        %p344 = pneg %p236
        %s345 = sand.u32 %s226, 1
        %s346 = scalar_lea.sflag [#allocation3], %s345
        %s347 = sand.u32 %s226, 1
        %s348 = smul.addr %s347, 64
        %s349 = scalar_lea.vmem [#allocation2], %s348
        %s350 = smul.u32 8, %s27
        %p351 = scmp.lt.s32.totalorder %s26, 1
        %s352 = scalar_select %p351, %s26, 1
        %p353 = scmp.lt.s32.totalorder %s350, 7
        %s354 = scalar_select %p353, %s350, 7
        %s355 = smul.addr %s352, 8
        %s356 = sadd.s32 %s354, %s355
        %s357 = smul.addr %s356, 4
        %s358 = scalar_lea.vmem %s0, %s357
        %s359 = smul.u32 8, %s27
        %s360 = smul.u32 8, %s27
        %p361 = scmp.lt.s32.totalorder %s26, 1
        %s362 = scalar_select %p361, %s26, 1
        %p363 = scmp.lt.s32.totalorder %s360, 7
        %s364 = scalar_select %p363, %s360, 7
        %s365 = smul.addr %s362, 8
        %s366 = sadd.s32 %s364, %s365
        %s367 = smul.addr %s366, 4
        %s368 = scalar_lea.vmem %s4, %s367
        %s369 = smul.u32 8, %s27
        %s370 = smul.u32 8, %s27
        %v372 = vld [vmem:[%s358] sm:$0xf]
        %v373 = vld [vmem:[%s358 + $0x4] sm:$0xf]
        %v374 = vld [vmem:[%s358 + $0x8] sm:$0xf]
        %v375 = vld [vmem:[%s358 + $0xc] sm:$0xf]
        %v376 = vld [vmem:[%s358 + $0x10] sm:$0xf]
        %v377 = vld [vmem:[%s358 + $0x14] sm:$0xf]
        %v378 = vld [vmem:[%s358 + $0x18] sm:$0xf]
        %v379 = vld [vmem:[%s358 + $0x1c] sm:$0xf]
        %v380 = vld [vmem:[%s1] sm:$0x3]
        %v389 = vunpack.c.l.b16 %v372
        %v390 = vunpack.c.l.b16 %v373
        %v391 = vunpack.c.l.b16 %v374
        %v392 = vunpack.c.l.b16 %v375
        %v393 = vunpack.c.l.b16 %v376
        %v394 = vunpack.c.l.b16 %v377
        %v395 = vunpack.c.l.b16 %v378
        %v396 = vunpack.c.l.b16 %v379
        %v397 = vpack.c.b16 %v390, %v389
        %v398 = vpack.c.b16 %v392, %v391
        %v399 = vpack.c.b16 %v394, %v393
        %v400 = vpack.c.b16 %v396, %v395
        %vm401 = vcmask 31744
        %v403 = vsel %vm401, %v397, 0
        %v406 = vsel %vm401, %v398, 0
        %v409 = vsel %vm401, %v399, 0
        %v412 = vsel %vm401, %v400, 0
        %vm414 = vcmask 1041408
        %v416 = vsel %vm414, %v380, 0
        %418 = vmatpush.bf16.msra.mxu0 0
        %419 = vmatpush.bf16.msra.mxu0 0
        %420 = vmatpush.bf16.msra.mxu0 0
        %421 = vmatpush.bf16.msra.mxu0 0
        %422 = vmatpush.bf16.msra.mxu0 0
        %423 = vmatpush.bf16.msra.mxu0 0
        %424 = vmatpush.bf16.msra.mxu0 0
        %425 = vmatpush.bf16.msra.mxu0 %v416
        %426 = vmatmul.bf16.gmra.mxu0 %v403
        %v427 = vpop.f32.mrf.mxu0
        %v428 = vadd.f32 0.0, %v427
        %v429 = vpop.f32.mrf.mxu0
        %v430 = vadd.f32 0.0, %v429
        %431 = vmatmul.bf16.gmra.mxu0 %v406
        %v432 = vpop.f32.mrf.mxu0
        %v433 = vadd.f32 0.0, %v432
        %v434 = vpop.f32.mrf.mxu0
        %v435 = vadd.f32 0.0, %v434
        %436 = vmatmul.bf16.gmra.mxu0 %v409
        %v437 = vpop.f32.mrf.mxu0
        %v438 = vadd.f32 0.0, %v437
        %v439 = vpop.f32.mrf.mxu0
        %v440 = vadd.f32 0.0, %v439
        %441 = vmatmul.bf16.gmra.mxu0 %v412
        %v442 = vpop.f32.mrf.mxu0
        %v443 = vadd.f32 0.0, %v442
        %v444 = vpop.f32.mrf.mxu0
        %v445 = vadd.f32 0.0, %v444
        %446 = vdwg.mxu0
        %v447 = vld [vmem:[%s2] sm:$0x1]
        %v449 = vperm.slane %v447, 0
        %v451 = vmul.f32 %v428, %v449
        %v452 = vmul.f32 %v430, %v449
        %v453 = vmul.f32 %v433, %v449
        %v454 = vmul.f32 %v435, %v449
        %v455 = vmul.f32 %v438, %v449
        %v456 = vmul.f32 %v440, %v449
        %v457 = vmul.f32 %v443, %v449
        %v458 = vmul.f32 %v445, %v449
        %v459 = vld [vmem:[%s3] sm:$0x1]
        %v461 = vperm.slane %v459, 0
        %v463 = vadd.f32 %v451, %v461
        %v464 = vadd.f32 %v452, %v461
        %v465 = vadd.f32 %v453, %v461
        %v466 = vadd.f32 %v454, %v461
        %v467 = vadd.f32 %v455, %v461
        %v468 = vadd.f32 %v456, %v461
        %v469 = vadd.f32 %v457, %v461
        %v470 = vadd.f32 %v458, %v461
        %v471 = vld [vmem:[%s368] sm:$0xf]
        %v472 = vld [vmem:[%s368 + $0x4] sm:$0xf]
        %v473 = vld [vmem:[%s368 + $0x8] sm:$0xf]
        %v474 = vld [vmem:[%s368 + $0xc] sm:$0xf]
        %v475 = vld [vmem:[%s368 + $0x10] sm:$0xf]
        %v476 = vld [vmem:[%s368 + $0x14] sm:$0xf]
        %v477 = vld [vmem:[%s368 + $0x18] sm:$0xf]
        %v478 = vld [vmem:[%s368 + $0x1c] sm:$0xf]
        %v479 = vld [vmem:[%s5] sm:$0x3]
        %v488 = vunpack.c.l.b16 %v471
        %v489 = vunpack.c.l.b16 %v472
        %v490 = vunpack.c.l.b16 %v473
        %v491 = vunpack.c.l.b16 %v474
        %v492 = vunpack.c.l.b16 %v475
        %v493 = vunpack.c.l.b16 %v476
        %v494 = vunpack.c.l.b16 %v477
        %v495 = vunpack.c.l.b16 %v478
        %v496 = vpack.c.b16 %v489, %v488
        %v497 = vpack.c.b16 %v491, %v490
        %v498 = vpack.c.b16 %v493, %v492
        %v499 = vpack.c.b16 %v495, %v494
        %v501 = vsel %vm401, %v496, 0
        %v504 = vsel %vm401, %v497, 0
        %v507 = vsel %vm401, %v498, 0
        %v510 = vsel %vm401, %v499, 0
        %v513 = vsel %vm414, %v479, 0
        %515 = vmatpush.bf16.msra.mxu0 0
        %516 = vmatpush.bf16.msra.mxu0 0
        %517 = vmatpush.bf16.msra.mxu0 0
        %518 = vmatpush.bf16.msra.mxu0 0
        %519 = vmatpush.bf16.msra.mxu0 0
        %520 = vmatpush.bf16.msra.mxu0 0
        %521 = vmatpush.bf16.msra.mxu0 0
        %522 = vmatpush.bf16.msra.mxu0 %v513
        %523 = vmatmul.bf16.gmra.mxu0 %v501
        %v524 = vpop.f32.mrf.mxu0
        %v525 = vadd.f32 0.0, %v524
        %v526 = vpop.f32.mrf.mxu0
        %v527 = vadd.f32 0.0, %v526
        %528 = vmatmul.bf16.gmra.mxu0 %v504
        %v529 = vpop.f32.mrf.mxu0
        %v530 = vadd.f32 0.0, %v529
        %v531 = vpop.f32.mrf.mxu0
        %v532 = vadd.f32 0.0, %v531
        %533 = vmatmul.bf16.gmra.mxu0 %v507
        %v534 = vpop.f32.mrf.mxu0
        %v535 = vadd.f32 0.0, %v534
        %v536 = vpop.f32.mrf.mxu0
        %v537 = vadd.f32 0.0, %v536
        %538 = vmatmul.bf16.gmra.mxu0 %v510
        %v539 = vpop.f32.mrf.mxu0
        %v540 = vadd.f32 0.0, %v539
        %v541 = vpop.f32.mrf.mxu0
        %v542 = vadd.f32 0.0, %v541
        %543 = vdwg.mxu0
        %v544 = vld [vmem:[%s6] sm:$0x1]
        %v546 = vperm.slane %v544, 0
        %v548 = vmul.f32 %v525, %v546
        %v549 = vmul.f32 %v527, %v546
        %v550 = vmul.f32 %v530, %v546
        %v551 = vmul.f32 %v532, %v546
        %v552 = vmul.f32 %v535, %v546
        %v553 = vmul.f32 %v537, %v546
        %v554 = vmul.f32 %v540, %v546
        %v555 = vmul.f32 %v542, %v546
        %v556 = vld [vmem:[%s7] sm:$0x1]
        %v558 = vperm.slane %v556, 0
        %v560 = vadd.f32 %v548, %v558
        %v561 = vadd.f32 %v549, %v558
        %v562 = vadd.f32 %v550, %v558
        %v563 = vadd.f32 %v551, %v558
        %v564 = vadd.f32 %v552, %v558
        %v565 = vadd.f32 %v553, %v558
        %v566 = vadd.f32 %v554, %v558
        %v567 = vadd.f32 %v555, %v558
        %v568 = vadd.f32 %v463, %v560
        %v569 = vadd.f32 %v464, %v561
        %v570 = vadd.f32 %v465, %v562
        %v571 = vadd.f32 %v466, %v563
        %v572 = vadd.f32 %v467, %v564
        %v573 = vadd.f32 %v468, %v565
        %v574 = vadd.f32 %v469, %v566
        %v575 = vadd.f32 %v470, %v567
        %v576 = vmax.f32 %v568, 0.0
        %v577 = vmax.f32 %v569, 0.0
        %v578 = vmax.f32 %v570, 0.0
        %v579 = vmax.f32 %v571, 0.0
        %v580 = vmax.f32 %v572, 0.0
        %v581 = vmax.f32 %v573, 0.0
        %v582 = vmax.f32 %v574, 0.0
        %v583 = vmax.f32 %v575, 0.0
        %vm584 = vcmask 130048
        %585 = vst.msk [vmem:[%s349] sm:$0xff] %vm584, %v576
        %586 = vst.msk [vmem:[%s349 + $0x8] sm:$0xff] %vm584, %v577
        %587 = vst.msk [vmem:[%s349 + $0x10] sm:$0xff] %vm584, %v578
        %588 = vst.msk [vmem:[%s349 + $0x18] sm:$0xff] %vm584, %v579
        %589 = vst.msk [vmem:[%s349 + $0x20] sm:$0xff] %vm584, %v580
        %590 = vst.msk [vmem:[%s349 + $0x28] sm:$0xff] %vm584, %v581
        %591 = vst.msk [vmem:[%s349 + $0x30] sm:$0xff] %vm584, %v582
        %592 = vst.msk [vmem:[%s349 + $0x38] sm:$0xff] %vm584, %v583
        %s593 = sand.u32 %s226, 1
        %s594 = scalar_lea.sflag [#allocation3], %s593
        %s595 = sand.u32 %s226, 1
        %s596 = smul.addr %s595, 64
        %s597 = scalar_lea.vmem [#allocation2], %s596
        // Predicated region
        $region53: #{bottleneck_forward.5} parent=51 // pred_check
          %p598 = pneg %p236
        $region54: #{bottleneck_forward.5} parent=51 // pred_check_branch
          %600 = sbr.rel (%p598) target = $region56
        $region55: #{bottleneck_forward.5} parent=51 // pred_region
          %s601 = smul.u32 8, %s27
          %603 = vsyncadd %s594, 0
          %s604 = smul.addr %s26, 8
          %s605 = sadd.s32 %s601, %s604
          %s606 = smul.addr %s605, 8
          %s607 = scalar_lea.hbm %s8, %s606
          %s608 = sshll.u32 %s597, 4
          %s609 = int_to_ptr.vmem [resolvable:$true] %s608
          %s610 = sshll.u32 %s607, 4
          %s611 = int_to_ptr.hbm [resolvable:$true] %s610
          %616 = dma.vmem_to_hbm [thread:$0]  %s609, 1024, %s611, %s594, 128, 128, 8
        $region56: #{bottleneck_forward.5} parent=51 // pred_fallthru
          _
      $region52: #{bottleneck_forward.5} parent=5 // pred_fallthru
        _
      %p617 = scmp.le.s32.totalorder 2, %s17
      // Predicated region
      $region57: #{bottleneck_forward.5} parent=5 // pred_check
        %p618 = pneg %p617
      $region58: #{bottleneck_forward.5} parent=5 // pred_check_branch
        %620 = sbr.rel (%p618) target = $region60
      $region59: #{bottleneck_forward.5} parent=5 // pred_region
        %s621 = ssub.s32 %s17, 2
        // Predicated region
        $region61: #{bottleneck_forward.5} parent=59 // pred_check
          %p622 = pneg %p242
        $region62: #{bottleneck_forward.5} parent=59 // pred_check_branch
          %624 = sbr.rel (%p622) target = $region64
        $region63: #{bottleneck_forward.5} parent=59 // pred_region
          %s625 = sand.u32 %s227, 1
          %s626 = scalar_lea.sflag [#allocation3], %s625
          %s627 = sand.u32 %s227, 1
          %s628 = smul.addr %s627, 64
          %s629 = scalar_lea.vmem [#allocation2], %s628
          %631 = dma.done %s626, 1024
        $region64: #{bottleneck_forward.5} parent=59 // pred_fallthru
          _
      $region60: #{bottleneck_forward.5} parent=5 // pred_fallthru
        _
    $region6: #{bottleneck_forward.5} parent=1 // loop_footer
      %s21 = sadd.s32 1, %s17
    $region7: #{bottleneck_forward.5} parent=1 // loop_footer_branch
      %16 = sbr.rel target = $region3
    $region8: #{bottleneck_forward.5} parent=1 // loop_exit
      _
    %632 = vsyncpa [#allocation3], 1
    %s633 = scalar_lea.sflag [#allocation3], 1
    %634 = vsyncpa %s633, 1

</llo_original>
